<compile_context>
chip_gen: v7x
topology: tpu7x:2x2x1
jax: 0.10.0
libtpu: 0.0.40
codegen_flags: <defaults>
</compile_context>

<pallas_src>
import jax
import jax.numpy as jnp
from jax import lax
from jax.experimental import pallas as pl
from jax.experimental.pallas import tpu as pltpu

NEG_SLOPE = 0.01               # F.leaky_relu_ default slope
EPS = 1e-5                     # nn.BatchNorm2d default eps
MATMUL_DTYPE = jnp.bfloat16    # MXU operand dtype (accumulation stays f32)


# ----------------------------- Pallas kernels ------------------------------ #

def _bn_act_conv_body(src_ref, scale_ref, shift_ref, mask_ref, w_ref,
                      stack_ref, shifts):
    """Fused BN-affine + leaky_relu + 3x3 conv (single K=9*C MXU matmul).

    src_ref:   (1, C, Lp)    padded + flattened activations (channels on sublanes)
    scale_ref: (C, 1)        folded BN scale
    shift_ref: (C, 1)        folded BN shift
    mask_ref:  (1, Lp)       1.0 at interior pixels, 0.0 at conv padding / lane pad
    w_ref:     (Cout, 9*C)   bf16 conv weights, tap-major then channel
    stack_ref: (9*C, Lp)     bf16 VMEM scratch holding the nine shifted tap views
    returns:   (Cout, Lp)    f32 conv result (garbage at padding columns)
    """
    c = src_ref.shape[1]
    lp = src_ref.shape[2]

    # BN + leaky_relu in f32, re-impose the conv zero padding (pad pixels would
    # otherwise become lrelu(shift) != 0), then a single cast to the MXU dtype.
    a = src_ref[0] * scale_ref[...] + shift_ref[...]
    a = jnp.where(a >= 0.0, a, NEG_SLOPE * a)
    a = (a * mask_ref[...]).astype(stack_ref.dtype)

    # Build the nine tap views as circular shifts: main slice + tiny wrap slice.
    # The wrapped lanes source only the first/last (Wp+1) flattened positions and the
    # lane pad, which are zeroed by the mask -> every scratch element is written exactly
    # once per step (no full zero-init, no stale-VMEM hazard).
    for k, s in enumerate(shifts):                # static Python ints
        r0 = k * c
        if s > 0:
            stack_ref[r0:r0 + c, 0:lp - s] = a[:, s:lp]
            stack_ref[r0:r0 + c, lp - s:lp] = a[:, 0:s]
        elif s < 0:
            t = -s
            stack_ref[r0:r0 + c, t:lp] = a[:, 0:lp - t]
            stack_ref[r0:r0 + c, 0:t] = a[:, lp - t:lp]
        else:
            stack_ref[r0:r0 + c, :] = a

    # One MXU matmul: (Cout, 9*C) @ (9*C, Lp) -> (Cout, Lp), lane-dense output.
    return jnp.dot(w_ref[...], stack_ref[...], preferred_element_type=jnp.float32)


def _make_conv1_kernel(shifts):
    """conv1: BN1 + lrelu + 3x3 conv, plus fused BN2-statistics partial sums."""
    def kernel(x_ref, scale_ref, shift_ref, mask_ref, w_ref,
               o_ref, sum_ref, sq_ref, stack_ref):
        y = _bn_act_conv_body(x_ref, scale_ref, shift_ref, mask_ref, w_ref,
                              stack_ref, shifts)
        o_ref[0] = y.astype(o_ref.dtype)
        # Per-channel masked sum / sum-of-squares over the interior (for BN2 fold).
        ym = y * mask_ref[...]
        sum_ref[0] = jnp.sum(ym, axis=-1, keepdims=True)
        sq_ref[0] = jnp.sum(ym * y, axis=-1, keepdims=True)
    return kernel


def _make_conv2_kernel(shifts, has_shortcut):
    """conv2: BN2 + lrelu + 3x3 conv + (1x1 shortcut | identity) residual."""
    if has_shortcut:
        def kernel(h_ref, x_ref, scale_ref, shift_ref, mask_ref, w_ref,
                   wres_ref, bres_ref, o_ref, stack_ref):
            y = _bn_act_conv_body(h_ref, scale_ref, shift_ref, mask_ref, w_ref,
                                  stack_ref, shifts)
            res = jnp.dot(wres_ref[...], x_ref[0].astype(wres_ref.dtype),
                          preferred_element_type=jnp.float32) + bres_ref[...]
            o_ref[0] = (y + res).astype(o_ref.dtype)
    else:
        def kernel(h_ref, x_ref, scale_ref, shift_ref, mask_ref, w_ref,
                   o_ref, stack_ref):
            y = _bn_act_conv_body(h_ref, scale_ref, shift_ref, mask_ref, w_ref,
                                  stack_ref, shifts)
            o_ref[0] = (y + x_ref[0]).astype(o_ref.dtype)   # exact identity residual
    return kernel


# ------------------------------ Spec helpers -------------------------------- #

def _physical_vmem_bytes():
    try:
        return int(pltpu.get_tpu_info().vmem_capacity_bytes)
    except Exception:
        return 64 * 1024 * 1024       # conservative (v7x per-TensorCore VMEM)


def _vmem_limit(block_bytes):
    """Computed VMEM budget: actual block/scratch need + slack, capped by hardware."""
    return int(min(max(block_bytes + (4 << 20), 16 << 20),
                   _physical_vmem_bytes() * 3 // 4))


def _const_spec(shape, single_buffer):
    """Grid-constant operand: resident across the grid; single-buffered if supported."""
    if single_buffer:
        return pl.BlockSpec(shape, lambda b: (0, 0), pipeline_mode=pl.Buffered(1))
    return pl.BlockSpec(shape, lambda b: (0, 0))


# -------------------------------- Wrappers ---------------------------------- #

def _fused_bn_act_conv3x3(x_flat, scale, shift, mask, w_big, shifts,
                          single_buffer_consts):
    """leaky_relu(BN(x)) -> 3x3 conv (bias=False) + BN2 stat partials, one kernel."""
    n, cin, lp = x_flat.shape
    cout = w_big.shape[0]
    const = lambda shape: _const_spec(shape, single_buffer_consts)
    need = (2 * cin * lp * 4 +            # input block (double buffered)
            2 * cout * lp * 4 +           # conv output block (double buffered)
            9 * cin * lp * 2 +            # bf16 shift-stack scratch
            cout * 9 * cin * 2 +          # bf16 weights
            lp * 4 + 2 * cin * 4 + 4 * cout * 4 + (64 << 10))
    return pl.pallas_call(
        _make_conv1_kernel(shifts),
        out_shape=(
            jax.ShapeDtypeStruct((n, cout, lp), x_flat.dtype),
            jax.ShapeDtypeStruct((n, cout, 1), jnp.float32),
            jax.ShapeDtypeStruct((n, cout, 1), jnp.float32),
        ),
        grid=(n,),
        in_specs=[
            pl.BlockSpec((1, cin, lp), lambda b: (b, 0, 0)),
            const((cin, 1)),
            const((cin, 1)),
            const((1, lp)),
            const((cout, 9 * cin)),
        ],
        out_specs=(
            pl.BlockSpec((1, cout, lp), lambda b: (b, 0, 0)),
            pl.BlockSpec((1, cout, 1), lambda b: (b, 0, 0)),
            pl.BlockSpec((1, cout, 1), lambda b: (b, 0, 0)),
        ),
        scratch_shapes=[pltpu.VMEM((9 * cin, lp), MATMUL_DTYPE)],
        compiler_params=pltpu.CompilerParams(
            dimension_semantics=("parallel",),
            vmem_limit_bytes=_vmem_limit(need)),
    )(x_flat, scale, shift, mask, w_big)


def _fused_bn_act_conv3x3_residual(h_flat, x_flat, scale, shift, mask, w_big,
                                   w_res, b_res, shifts, single_buffer_consts):
    """leaky_relu(BN(h)) -> 3x3 conv + (1x1 shortcut(x) or identity x), fused."""
    n, cmid, lp = h_flat.shape
    cin = x_flat.shape[1]
    cout = w_big.shape[0]
    has_shortcut = w_res is not None
    const = lambda shape: _const_spec(shape, single_buffer_consts)
    need = (2 * cmid * lp * 4 + 2 * cin * lp * 4 + 2 * cout * lp * 4 +
            9 * cmid * lp * 2 + cout * 9 * cmid * 2 + lp * 4 + 2 * cmid * 4 +
            (cout * cin * 2 + cout * 4 if has_shortcut else 0) + (64 << 10))

    in_specs = [
        pl.BlockSpec((1, cmid, lp), lambda b: (b, 0, 0)),
        pl.BlockSpec((1, cin, lp), lambda b: (b, 0, 0)),
        const((cmid, 1)),
        const((cmid, 1)),
        const((1, lp)),
        const((cout, 9 * cmid)),
    ]
    args = [h_flat, x_flat, scale, shift, mask, w_big]
    if has_shortcut:
        in_specs += [const((cout, cin)), const((cout, 1))]
        args += [w_res, b_res]

    return pl.pallas_call(
        _make_conv2_kernel(shifts, has_shortcut),
        out_shape=jax.ShapeDtypeStruct((n, cout, lp), h_flat.dtype),
        grid=(n,),
        in_specs=in_specs,
        out_specs=pl.BlockSpec((1, cout, lp), lambda b: (b, 0, 0)),
        scratch_shapes=[pltpu.VMEM((9 * cmid, lp), MATMUL_DTYPE)],
        compiler_params=pltpu.CompilerParams(
            dimension_semantics=("parallel",),
            vmem_limit_bytes=_vmem_limit(need)),
    )(*args)


# --------------------------------- Glue ------------------------------------- #

def _taps_weight(w_oihw):
    """(Cout, Cin, 3, 3) -> (Cout, 9*Cin) bf16, tap-major (dy, dx) then channel."""
    cout, cin = w_oihw.shape[0], w_oihw.shape[1]
    return (jnp.transpose(w_oihw, (2, 3, 1, 0))
            .reshape(9 * cin, cout).T.astype(MATMUL_DTYPE))


def to_padded_layout(x_nchw):
    """NCHW -> zero-padded, flattened, lane-padded (N, C, Lp) layout + interior mask."""
    n, c, H, W = x_nchw.shape
    Hp, Wp = H + 2, W + 2
    L = Hp * Wp
    Lp = ((L + 127) // 128) * 128
    x_flat = jnp.pad(x_nchw, ((0, 0), (0, 0), (1, 1), (1, 1))).reshape(n, c, L)
    x_flat = jnp.pad(x_flat, ((0, 0), (0, 0), (0, Lp - L)))
    mask = jnp.pad(jnp.ones((H, W), jnp.float32), ((1, 1), (1, 1))).reshape(1, L)
    mask = jnp.pad(mask, ((0, 0), (0, Lp - L)))
    return x_flat, mask


def from_padded_layout(y_flat, H, W):
    n, c, _ = y_flat.shape
    Hp, Wp = H + 2, W + 2
    L = Hp * Wp
    return y_flat[:, :, :L].reshape(n, c, Hp, Wp)[:, :, 1:H + 1, 1:W + 1]


def conv_block_forward_padded(x_flat, mask, params, hw, *,
                              single_buffer_consts=True):
    """ConvBlock forward in the padded (N, C, Lp) layout (chain-friendly)."""
    H, W = hw
    n, cin, _ = x_flat.shape
    Wp = W + 2
    nhw = n * H * W
    cout = params["conv1_w"].shape[0]

    # Flattened-image lane shifts of the nine 3x3 taps (static Python ints).
    shifts = [(dy - 1) * Wp + (dx - 1) for dy in range(3) for dx in range(3)]

    # BN1 fold (training-mode batch stats).  Padding columns are zero, so plain sums
    # over the padded layout already reduce the interior only.
    mean1 = jnp.sum(x_flat, axis=(0, 2)) / nhw
    var1 = jnp.maximum(jnp.sum(x_flat * x_flat, axis=(0, 2)) / nhw - mean1 * mean1, 0.0)
    scale1 = params["bn1_gamma"] / jnp.sqrt(var1 + EPS)
    shift1 = params["bn1_beta"] - mean1 * scale1

    # Kernel 1: BN1 + lrelu + conv1, with fused BN2 partial statistics.
    h, h_sum, h_sq = _fused_bn_act_conv3x3(
        x_flat, scale1.reshape(cin, 1), shift1.reshape(cin, 1), mask,
        _taps_weight(params["conv1_w"]), shifts, single_buffer_consts)

    # BN2 fold from the kernel-emitted per-(batch, channel) sums (no HBM pass over h).
    mean2 = jnp.sum(h_sum[:, :, 0], axis=0) / nhw
    var2 = jnp.maximum(jnp.sum(h_sq[:, :, 0], axis=0) / nhw - mean2 * mean2, 0.0)
    scale2 = params["bn2_gamma"] / jnp.sqrt(var2 + EPS)
    shift2 = params["bn2_beta"] - mean2 * scale2

    if "shortcut_w" in params:
        w_res = params["shortcut_w"].reshape(cout, cin).astype(MATMUL_DTYPE)
        b_res = params["shortcut_b"].reshape(cout, 1).astype(jnp.float32)
    else:
        w_res, b_res = None, None

    # Kernel 2: BN2 + lrelu + conv2 + shortcut/identity residual.
    return _fused_bn_act_conv3x3_residual(
        h, x_flat, scale2.reshape(cout, 1), shift2.reshape(cout, 1), mask,
        _taps_weight(params["conv2_w"]), w_res, b_res, shifts,
        single_buffer_consts)


def conv_block_forward(x_nchw, params):
    """NCHW in / NCHW out (single block).  Chained blocks should stay in the padded
    layout via conv_block_forward_padded and skip the slices here."""
    H, W = x_nchw.shape[2], x_nchw.shape[3]
    x_flat, mask = to_padded_layout(x_nchw)
    try:
        out_flat = conv_block_forward_padded(x_flat, mask, params, (H, W),
                                             single_buffer_consts=True)
    except Exception:
        # TODO(synk): pipeline_mode=pl.Buffered(1) rejected by this jax version;
        # fall back to default double-buffered constant operands.
        out_flat = conv_block_forward_padded(x_flat, mask, params, (H, W),
                                             single_buffer_consts=False)
    return from_padded_layout(out_flat, H, W)


# ---------------------------- Pure-JAX reference ---------------------------- #

def reference_forward(x, params, matmul_dtype=jnp.float32):
    """ConvBlock reference.  matmul_dtype=bfloat16 mirrors the kernel's MXU operand
    precision (f32 accumulation) for a tight numerical comparison."""
    def bn(v, g, b):
        mean = jnp.mean(v, axis=(0, 2, 3), keepdims=True)
        var = jnp.mean(jnp.square(v - mean), axis=(0, 2, 3), keepdims=True)
        return ((v - mean) / jnp.sqrt(var + EPS)
                * g[None, :, None, None] + b[None, :, None, None])

    def lrelu(v):
        return jnp.where(v >= 0, v, NEG_SLOPE * v)

    def conv(v, w, pad):
        return lax.conv_general_dilated(
            v.astype(matmul_dtype), w.astype(matmul_dtype), (1, 1),
            [(pad, pad), (pad, pad)],
            dimension_numbers=("NCHW", "OIHW", "NCHW"),
            preferred_element_type=jnp.float32)

    h = conv(lrelu(bn(x, params["bn1_gamma"], params["bn1_beta"])),
             params["conv1_w"], 1)
    h = conv(lrelu(bn(h, params["bn2_gamma"], params["bn2_beta"])),
             params["conv2_w"], 1)
    if "shortcut_w" in params:
        sc = (conv(x, params["shortcut_w"], 0)
              + params["shortcut_b"][None, :, None, None])
    else:
        sc = x
    return sc + h


# --------------------------------- Main ------------------------------------- #

if __name__ == "__main__":
    N, CIN, COUT, H, W = 2, 4, 8, 16, 16

    key = jax.random.PRNGKey(0)
    keys = jax.random.split(key, 8)
    params = {
        "bn1_gamma": 1.0 + 0.1 * jax.random.normal(keys[0], (CIN,), jnp.float32),
        "bn1_beta": 0.1 * jax.random.normal(keys[1], (CIN,), jnp.float32),
        "bn2_gamma": 1.0 + 0.1 * jax.random.normal(keys[2], (COUT,), jnp.float32),
        "bn2_beta": 0.1 * jax.random.normal(keys[3], (COUT,), jnp.float32),
        "conv1_w": 0.1 * jax.random.normal(keys[4], (COUT, CIN, 3, 3), jnp.float32),
        "conv2_w": 0.1 * jax.random.normal(keys[5], (COUT, COUT, 3, 3), jnp.float32),
        "shortcut_w": 0.1 * jax.random.normal(keys[6], (COUT, CIN, 1, 1), jnp.float32),
        "shortcut_b": 0.1 * jax.random.normal(keys[7], (COUT,), jnp.float32),
    }
    x = jax.random.normal(jax.random.PRNGKey(1), (N, CIN, H, W), jnp.float32)

    out = jax.block_until_ready(conv_block_forward(x, params))
    assert out.shape == (N, COUT, H, W), out.shape

    # Tight check against a reference using the same bf16 MXU-operand precision.
    ref_bf16 = jax.block_until_ready(reference_forward(x, params, jnp.bfloat16))
    assert jnp.allclose(out, ref_bf16, atol=5e-3, rtol=5e-3), (
        float(jnp.max(jnp.abs(out - ref_bf16))))

    # Loose sanity check against the full-f32 module semantics.
    ref_f32 = jax.block_until_ready(reference_forward(x, params))
    assert jnp.allclose(out, ref_f32, atol=1e-1, rtol=1e-1), (
        float(jnp.max(jnp.abs(out - ref_f32))))

    print("KERNEL_OK")
</pallas_src>

<mosaic_0001>
module attributes {stable_mosaic.version = 11 : i64} {
  func.func @kernel(%arg0: i32, %arg1: memref<1x4x384xf32, #tpu.memory_space<vmem>>, %arg2: memref<4x1xf32, #tpu.memory_space<vmem>>, %arg3: memref<4x1xf32, #tpu.memory_space<vmem>>, %arg4: memref<1x384xf32, #tpu.memory_space<vmem>>, %arg5: memref<8x36xbf16, #tpu.memory_space<vmem>>, %arg6: memref<1x8x384xf32, #tpu.memory_space<vmem>>, %arg7: memref<1x8x1xf32, #tpu.memory_space<vmem>>, %arg8: memref<1x8x1xf32, #tpu.memory_space<vmem>>, %arg9: memref<36x384xbf16, #tpu.memory_space<vmem>>) attributes {dimension_semantics = [#tpu.dimension_semantics<parallel>], iteration_bounds = array<i64: 2>, scalar_prefetch = 0 : i64, scratch_operands = 1 : i64, tpu.core_type = #tpu.core_type<tc>, window_params = [{transform_indices = @transform_0, window_bounds = array<i64: 1, 4, 384>}, {pipeline_mode = #tpu.pipeline_mode<synchronous>, transform_indices = @transform_1, window_bounds = array<i64: 4, 1>}, {pipeline_mode = #tpu.pipeline_mode<synchronous>, transform_indices = @transform_2, window_bounds = array<i64: 4, 1>}, {pipeline_mode = #tpu.pipeline_mode<synchronous>, transform_indices = @transform_3, window_bounds = array<i64: 1, 384>}, {pipeline_mode = #tpu.pipeline_mode<synchronous>, transform_indices = @transform_4, window_bounds = array<i64: 8, 36>}, {transform_indices = @transform_5, window_bounds = array<i64: 1, 8, 384>}, {transform_indices = @transform_6, window_bounds = array<i64: 1, 8, 1>}, {transform_indices = @transform_7, window_bounds = array<i64: 1, 8, 1>}]} {
    %c0 = arith.constant 0 : index
    %c0_0 = arith.constant 0 : index
    %c0_1 = arith.constant 0 : index
    %0 = vector.load %arg1[%c0, %c0_0, %c0_1] : memref<1x4x384xf32, #tpu.memory_space<vmem>>, vector<1x4x384xf32>
    %1 = vector.shape_cast %0 : vector<1x4x384xf32> to vector<4x384xf32>
    %c0_2 = arith.constant 0 : index
    %c0_3 = arith.constant 0 : index
    %2 = vector.load %arg2[%c0_2, %c0_3] : memref<4x1xf32, #tpu.memory_space<vmem>>, vector<4x1xf32>
    %3 = vector.broadcast %2 : vector<4x1xf32> to vector<4x384xf32>
    %4 = arith.mulf %1, %3 : vector<4x384xf32>
    %c0_4 = arith.constant 0 : index
    %c0_5 = arith.constant 0 : index
    %5 = vector.load %arg3[%c0_4, %c0_5] : memref<4x1xf32, #tpu.memory_space<vmem>>, vector<4x1xf32>
    %6 = vector.broadcast %5 : vector<4x1xf32> to vector<4x384xf32>
    %7 = arith.addf %4, %6 : vector<4x384xf32>
    %cst = arith.constant 0.000000e+00 : f32
    %8 = vector.broadcast %cst : f32 to vector<4x384xf32>
    %9 = arith.cmpf oge, %7, %8 : vector<4x384xf32>
    %cst_6 = arith.constant 0.00999999977 : f32
    %10 = vector.broadcast %cst_6 : f32 to vector<4x384xf32>
    %11 = arith.mulf %10, %7 : vector<4x384xf32>
    %12 = arith.select %9, %7, %11 : vector<4x384xi1>, vector<4x384xf32>
    %c0_7 = arith.constant 0 : index
    %c0_8 = arith.constant 0 : index
    %13 = vector.load %arg4[%c0_7, %c0_8] : memref<1x384xf32, #tpu.memory_space<vmem>>, vector<1x384xf32>
    %14 = vector.broadcast %13 : vector<1x384xf32> to vector<4x384xf32>
    %15 = arith.mulf %12, %14 : vector<4x384xf32>
    %16 = arith.truncf %15 : vector<4x384xf32> to vector<4x384xbf16>
    %17 = vector.extract_strided_slice %16 {offsets = [0, 0], sizes = [4, 365], strides = [1, 1]} : vector<4x384xbf16> to vector<4x365xbf16>
    %c0_9 = arith.constant 0 : index
    %c19 = arith.constant 19 : index
    %18 = vector.load %arg9[%c0_9, %c19] : memref<36x384xbf16, #tpu.memory_space<vmem>>, vector<4x365xbf16>
    tpu.vector_store %arg9[%c0_9, %c19], %17 {strides = array<i32>} : memref<36x384xbf16, #tpu.memory_space<vmem>>, vector<4x365xbf16>,
    %19 = vector.extract_strided_slice %16 {offsets = [0, 365], sizes = [4, 19], strides = [1, 1]} : vector<4x384xbf16> to vector<4x19xbf16>
    %c0_10 = arith.constant 0 : index
    %c0_11 = arith.constant 0 : index
    %20 = vector.load %arg9[%c0_10, %c0_11] : memref<36x384xbf16, #tpu.memory_space<vmem>>, vector<4x19xbf16>
    tpu.vector_store %arg9[%c0_10, %c0_11], %19 {strides = array<i32>} : memref<36x384xbf16, #tpu.memory_space<vmem>>, vector<4x19xbf16>,
    %21 = vector.extract_strided_slice %16 {offsets = [0, 0], sizes = [4, 366], strides = [1, 1]} : vector<4x384xbf16> to vector<4x366xbf16>
    %c4 = arith.constant 4 : index
    %c18 = arith.constant 18 : index
    %22 = vector.load %arg9[%c4, %c18] : memref<36x384xbf16, #tpu.memory_space<vmem>>, vector<4x366xbf16>
    tpu.vector_store %arg9[%c4, %c18], %21 {strides = array<i32>} : memref<36x384xbf16, #tpu.memory_space<vmem>>, vector<4x366xbf16>,
    %23 = vector.extract_strided_slice %16 {offsets = [0, 366], sizes = [4, 18], strides = [1, 1]} : vector<4x384xbf16> to vector<4x18xbf16>
    %c4_12 = arith.constant 4 : index
    %c0_13 = arith.constant 0 : index
    %24 = vector.load %arg9[%c4_12, %c0_13] : memref<36x384xbf16, #tpu.memory_space<vmem>>, vector<4x18xbf16>
    tpu.vector_store %arg9[%c4_12, %c0_13], %23 {strides = array<i32>} : memref<36x384xbf16, #tpu.memory_space<vmem>>, vector<4x18xbf16>,
    %25 = vector.extract_strided_slice %16 {offsets = [0, 0], sizes = [4, 367], strides = [1, 1]} : vector<4x384xbf16> to vector<4x367xbf16>
    %c8 = arith.constant 8 : index
    %c17 = arith.constant 17 : index
    %26 = vector.load %arg9[%c8, %c17] : memref<36x384xbf16, #tpu.memory_space<vmem>>, vector<4x367xbf16>
    tpu.vector_store %arg9[%c8, %c17], %25 {strides = array<i32>} : memref<36x384xbf16, #tpu.memory_space<vmem>>, vector<4x367xbf16>,
    %27 = vector.extract_strided_slice %16 {offsets = [0, 367], sizes = [4, 17], strides = [1, 1]} : vector<4x384xbf16> to vector<4x17xbf16>
    %c8_14 = arith.constant 8 : index
    %c0_15 = arith.constant 0 : index
    %28 = vector.load %arg9[%c8_14, %c0_15] : memref<36x384xbf16, #tpu.memory_space<vmem>>, vector<4x17xbf16>
    tpu.vector_store %arg9[%c8_14, %c0_15], %27 {strides = array<i32>} : memref<36x384xbf16, #tpu.memory_space<vmem>>, vector<4x17xbf16>,
    %29 = vector.extract_strided_slice %16 {offsets = [0, 0], sizes = [4, 383], strides = [1, 1]} : vector<4x384xbf16> to vector<4x383xbf16>
    %c12 = arith.constant 12 : index
    %c1 = arith.constant 1 : index
    %30 = vector.load %arg9[%c12, %c1] : memref<36x384xbf16, #tpu.memory_space<vmem>>, vector<4x383xbf16>
    tpu.vector_store %arg9[%c12, %c1], %29 {strides = array<i32>} : memref<36x384xbf16, #tpu.memory_space<vmem>>, vector<4x383xbf16>,
    %31 = vector.extract_strided_slice %16 {offsets = [0, 383], sizes = [4, 1], strides = [1, 1]} : vector<4x384xbf16> to vector<4x1xbf16>
    %c12_16 = arith.constant 12 : index
    %c0_17 = arith.constant 0 : index
    %32 = vector.load %arg9[%c12_16, %c0_17] : memref<36x384xbf16, #tpu.memory_space<vmem>>, vector<4x1xbf16>
    tpu.vector_store %arg9[%c12_16, %c0_17], %31 {strides = array<i32>} : memref<36x384xbf16, #tpu.memory_space<vmem>>, vector<4x1xbf16>,
    %c16 = arith.constant 16 : index
    %c0_18 = arith.constant 0 : index
    %33 = vector.load %arg9[%c16, %c0_18] : memref<36x384xbf16, #tpu.memory_space<vmem>>, vector<4x384xbf16>
    tpu.vector_store %arg9[%c16, %c0_18], %16 {strides = array<i32>} : memref<36x384xbf16, #tpu.memory_space<vmem>>, vector<4x384xbf16>,
    %34 = vector.extract_strided_slice %16 {offsets = [0, 1], sizes = [4, 383], strides = [1, 1]} : vector<4x384xbf16> to vector<4x383xbf16>
    %c20 = arith.constant 20 : index
    %c0_19 = arith.constant 0 : index
    %35 = vector.load %arg9[%c20, %c0_19] : memref<36x384xbf16, #tpu.memory_space<vmem>>, vector<4x383xbf16>
    tpu.vector_store %arg9[%c20, %c0_19], %34 {strides = array<i32>} : memref<36x384xbf16, #tpu.memory_space<vmem>>, vector<4x383xbf16>,
    %36 = vector.extract_strided_slice %16 {offsets = [0, 0], sizes = [4, 1], strides = [1, 1]} : vector<4x384xbf16> to vector<4x1xbf16>
    %c20_20 = arith.constant 20 : index
    %c383 = arith.constant 383 : index
    %37 = vector.load %arg9[%c20_20, %c383] : memref<36x384xbf16, #tpu.memory_space<vmem>>, vector<4x1xbf16>
    tpu.vector_store %arg9[%c20_20, %c383], %36 {strides = array<i32>} : memref<36x384xbf16, #tpu.memory_space<vmem>>, vector<4x1xbf16>,
    %38 = vector.extract_strided_slice %16 {offsets = [0, 17], sizes = [4, 367], strides = [1, 1]} : vector<4x384xbf16> to vector<4x367xbf16>
    %c24 = arith.constant 24 : index
    %c0_21 = arith.constant 0 : index
    %39 = vector.load %arg9[%c24, %c0_21] : memref<36x384xbf16, #tpu.memory_space<vmem>>, vector<4x367xbf16>
    tpu.vector_store %arg9[%c24, %c0_21], %38 {strides = array<i32>} : memref<36x384xbf16, #tpu.memory_space<vmem>>, vector<4x367xbf16>,
    %40 = vector.extract_strided_slice %16 {offsets = [0, 0], sizes = [4, 17], strides = [1, 1]} : vector<4x384xbf16> to vector<4x17xbf16>
    %c24_22 = arith.constant 24 : index
    %c367 = arith.constant 367 : index
    %41 = vector.load %arg9[%c24_22, %c367] : memref<36x384xbf16, #tpu.memory_space<vmem>>, vector<4x17xbf16>
    tpu.vector_store %arg9[%c24_22, %c367], %40 {strides = array<i32>} : memref<36x384xbf16, #tpu.memory_space<vmem>>, vector<4x17xbf16>,
    %42 = vector.extract_strided_slice %16 {offsets = [0, 18], sizes = [4, 366], strides = [1, 1]} : vector<4x384xbf16> to vector<4x366xbf16>
    %c28 = arith.constant 28 : index
    %c0_23 = arith.constant 0 : index
    %43 = vector.load %arg9[%c28, %c0_23] : memref<36x384xbf16, #tpu.memory_space<vmem>>, vector<4x366xbf16>
    tpu.vector_store %arg9[%c28, %c0_23], %42 {strides = array<i32>} : memref<36x384xbf16, #tpu.memory_space<vmem>>, vector<4x366xbf16>,
    %44 = vector.extract_strided_slice %16 {offsets = [0, 0], sizes = [4, 18], strides = [1, 1]} : vector<4x384xbf16> to vector<4x18xbf16>
    %c28_24 = arith.constant 28 : index
    %c366 = arith.constant 366 : index
    %45 = vector.load %arg9[%c28_24, %c366] : memref<36x384xbf16, #tpu.memory_space<vmem>>, vector<4x18xbf16>
    tpu.vector_store %arg9[%c28_24, %c366], %44 {strides = array<i32>} : memref<36x384xbf16, #tpu.memory_space<vmem>>, vector<4x18xbf16>,
    %46 = vector.extract_strided_slice %16 {offsets = [0, 19], sizes = [4, 365], strides = [1, 1]} : vector<4x384xbf16> to vector<4x365xbf16>
    %c32 = arith.constant 32 : index
    %c0_25 = arith.constant 0 : index
    %47 = vector.load %arg9[%c32, %c0_25] : memref<36x384xbf16, #tpu.memory_space<vmem>>, vector<4x365xbf16>
    tpu.vector_store %arg9[%c32, %c0_25], %46 {strides = array<i32>} : memref<36x384xbf16, #tpu.memory_space<vmem>>, vector<4x365xbf16>,
    %48 = vector.extract_strided_slice %16 {offsets = [0, 0], sizes = [4, 19], strides = [1, 1]} : vector<4x384xbf16> to vector<4x19xbf16>
    %c32_26 = arith.constant 32 : index
    %c365 = arith.constant 365 : index
    %49 = vector.load %arg9[%c32_26, %c365] : memref<36x384xbf16, #tpu.memory_space<vmem>>, vector<4x19xbf16>
    tpu.vector_store %arg9[%c32_26, %c365], %48 {strides = array<i32>} : memref<36x384xbf16, #tpu.memory_space<vmem>>, vector<4x19xbf16>,
    %c0_27 = arith.constant 0 : index
    %c0_28 = arith.constant 0 : index
    %50 = vector.load %arg5[%c0_27, %c0_28] : memref<8x36xbf16, #tpu.memory_space<vmem>>, vector<8x36xbf16>
    %c0_29 = arith.constant 0 : index
    %c0_30 = arith.constant 0 : index
    %51 = vector.load %arg9[%c0_29, %c0_30] : memref<36x384xbf16, #tpu.memory_space<vmem>>, vector<36x384xbf16>
    %cst_31 = arith.constant dense<0.000000e+00> : vector<8x384xf32>
    %52 = tpu.matmul %50, %51, %cst_31 {dimension_numbers = #tpu.dot_dimension_numbers<[1], [0], [0], [1], [0, 0, 1, 1], [], []>} : vector<8x36xbf16>, vector<36x384xbf16>, vector<8x384xf32> -> vector<8x384xf32>
    %c0_32 = arith.constant 0 : index
    %c0_33 = arith.constant 0 : index
    %c0_34 = arith.constant 0 : index
    %53 = vector.load %arg6[%c0_32, %c0_33, %c0_34] : memref<1x8x384xf32, #tpu.memory_space<vmem>>, vector<1x8x384xf32>
    %54 = vector.shape_cast %53 : vector<1x8x384xf32> to vector<8x384xf32>
    %55 = vector.shape_cast %52 : vector<8x384xf32> to vector<1x8x384xf32>
    tpu.vector_store %arg6[%c0_32, %c0_33, %c0_34], %55 {strides = array<i32>} : memref<1x8x384xf32, #tpu.memory_space<vmem>>, vector<1x8x384xf32>,
    %c0_35 = arith.constant 0 : index
    %c0_36 = arith.constant 0 : index
    %56 = vector.load %arg4[%c0_35, %c0_36] : memref<1x384xf32, #tpu.memory_space<vmem>>, vector<1x384xf32>
    %57 = vector.broadcast %56 : vector<1x384xf32> to vector<8x384xf32>
    %58 = arith.mulf %52, %57 : vector<8x384xf32>
    %cst_37 = arith.constant dense<0.000000e+00> : vector<8xf32>
    %59 = vector.multi_reduction <add>, %58, %cst_37 [1] : vector<8x384xf32> to vector<8xf32>
    %60 = vector.shape_cast %59 : vector<8xf32> to vector<8x1xf32>
    %c0_38 = arith.constant 0 : index
    %c0_39 = arith.constant 0 : index
    %c0_40 = arith.constant 0 : index
    %61 = vector.load %arg7[%c0_38, %c0_39, %c0_40] : memref<1x8x1xf32, #tpu.memory_space<vmem>>, vector<1x8x1xf32>
    %62 = vector.shape_cast %61 : vector<1x8x1xf32> to vector<8x1xf32>
    %63 = vector.shape_cast %60 : vector<8x1xf32> to vector<1x8x1xf32>
    tpu.vector_store %arg7[%c0_38, %c0_39, %c0_40], %63 {strides = array<i32>} : memref<1x8x1xf32, #tpu.memory_space<vmem>>, vector<1x8x1xf32>,
    %64 = arith.mulf %58, %52 : vector<8x384xf32>
    %cst_41 = arith.constant dense<0.000000e+00> : vector<8xf32>
    %65 = vector.multi_reduction <add>, %64, %cst_41 [1] : vector<8x384xf32> to vector<8xf32>
    %66 = vector.shape_cast %65 : vector<8xf32> to vector<8x1xf32>
    %c0_42 = arith.constant 0 : index
    %c0_43 = arith.constant 0 : index
    %c0_44 = arith.constant 0 : index
    %67 = vector.load %arg8[%c0_42, %c0_43, %c0_44] : memref<1x8x1xf32, #tpu.memory_space<vmem>>, vector<1x8x1xf32>
    %68 = vector.shape_cast %67 : vector<1x8x1xf32> to vector<8x1xf32>
    %69 = vector.shape_cast %66 : vector<8x1xf32> to vector<1x8x1xf32>
    tpu.vector_store %arg8[%c0_42, %c0_43, %c0_44], %69 {strides = array<i32>} : memref<1x8x1xf32, #tpu.memory_space<vmem>>, vector<1x8x1xf32>,
    return
  }
  func.func @transform_0(%arg0: i32) -> (i32, i32, i32) {
    %c0_i32 = arith.constant 0 : i32
    %c0_i32_0 = arith.constant 0 : i32
    %c0_i32_1 = arith.constant 0 : i32
    return %arg0, %c0_i32, %c0_i32_0 : i32, i32, i32
  }
  func.func @transform_1(%arg0: i32) -> (i32, i32) {
    %c0_i32 = arith.constant 0 : i32
    %c0_i32_0 = arith.constant 0 : i32
    %c0_i32_1 = arith.constant 0 : i32
    return %c0_i32, %c0_i32_0 : i32, i32
  }
  func.func @transform_2(%arg0: i32) -> (i32, i32) {
    %c0_i32 = arith.constant 0 : i32
    %c0_i32_0 = arith.constant 0 : i32
    %c0_i32_1 = arith.constant 0 : i32
    return %c0_i32, %c0_i32_0 : i32, i32
  }
  func.func @transform_3(%arg0: i32) -> (i32, i32) {
    %c0_i32 = arith.constant 0 : i32
    %c0_i32_0 = arith.constant 0 : i32
    %c0_i32_1 = arith.constant 0 : i32
    return %c0_i32, %c0_i32_0 : i32, i32
  }
  func.func @transform_4(%arg0: i32) -> (i32, i32) {
    %c0_i32 = arith.constant 0 : i32
    %c0_i32_0 = arith.constant 0 : i32
    %c0_i32_1 = arith.constant 0 : i32
    return %c0_i32, %c0_i32_0 : i32, i32
  }
  func.func @transform_5(%arg0: i32) -> (i32, i32, i32) {
    %c0_i32 = arith.constant 0 : i32
    %c0_i32_0 = arith.constant 0 : i32
    %c0_i32_1 = arith.constant 0 : i32
    return %arg0, %c0_i32, %c0_i32_0 : i32, i32, i32
  }
  func.func @transform_6(%arg0: i32) -> (i32, i32, i32) {
    %c0_i32 = arith.constant 0 : i32
    %c0_i32_0 = arith.constant 0 : i32
    %c0_i32_1 = arith.constant 0 : i32
    return %arg0, %c0_i32, %c0_i32_0 : i32, i32, i32
  }
  func.func @transform_7(%arg0: i32) -> (i32, i32, i32) {
    %c0_i32 = arith.constant 0 : i32
    %c0_i32_0 = arith.constant 0 : i32
    %c0_i32_1 = arith.constant 0 : i32
    return %arg0, %c0_i32, %c0_i32_0 : i32, i32, i32
  }
}

module attributes {stable_mosaic.version = 11 : i64} {
  func.func @kernel(%arg0: i32, %arg1: memref<1x4x384xf32, #tpu.memory_space<vmem>>, %arg2: memref<4x1xf32, #tpu.memory_space<vmem>>, %arg3: memref<4x1xf32, #tpu.memory_space<vmem>>, %arg4: memref<1x384xf32, #tpu.memory_space<vmem>>, %arg5: memref<8x36xbf16, #tpu.memory_space<vmem>>, %arg6: memref<1x8x384xf32, #tpu.memory_space<vmem>>, %arg7: memref<1x8x1xf32, #tpu.memory_space<vmem>>, %arg8: memref<1x8x1xf32, #tpu.memory_space<vmem>>, %arg9: memref<36x384xbf16, #tpu.memory_space<vmem>>) attributes {dimension_semantics = [#tpu.dimension_semantics<parallel>], iteration_bounds = array<i64: 2>, scalar_prefetch = 0 : i64, scratch_operands = 1 : i64, tpu.core_type = #tpu.core_type<tc>, window_params = [{transform_indices = @transform_0, window_bounds = array<i64: 1, 4, 384>}, {pipeline_mode = #tpu.pipeline_mode<synchronous>, transform_indices = @transform_1, window_bounds = array<i64: 4, 1>}, {pipeline_mode = #tpu.pipeline_mode<synchronous>, transform_indices = @transform_2, window_bounds = array<i64: 4, 1>}, {pipeline_mode = #tpu.pipeline_mode<synchronous>, transform_indices = @transform_3, window_bounds = array<i64: 1, 384>}, {pipeline_mode = #tpu.pipeline_mode<synchronous>, transform_indices = @transform_4, window_bounds = array<i64: 8, 36>}, {transform_indices = @transform_5, window_bounds = array<i64: 1, 8, 384>}, {transform_indices = @transform_6, window_bounds = array<i64: 1, 8, 1>}, {transform_indices = @transform_7, window_bounds = array<i64: 1, 8, 1>}]} {
    %c0 = arith.constant 0 : index
    %c0_0 = arith.constant 0 : index
    %c0_1 = arith.constant 0 : index
    %0 = vector.load %arg1[%c0, %c0_0, %c0_1] : memref<1x4x384xf32, #tpu.memory_space<vmem>>, vector<1x4x384xf32>
    %1 = vector.shape_cast %0 : vector<1x4x384xf32> to vector<4x384xf32>
    %c0_2 = arith.constant 0 : index
    %c0_3 = arith.constant 0 : index
    %2 = vector.load %arg2[%c0_2, %c0_3] : memref<4x1xf32, #tpu.memory_space<vmem>>, vector<4x1xf32>
    %3 = vector.broadcast %2 : vector<4x1xf32> to vector<4x384xf32>
    %4 = arith.mulf %1, %3 : vector<4x384xf32>
    %c0_4 = arith.constant 0 : index
    %c0_5 = arith.constant 0 : index
    %5 = vector.load %arg3[%c0_4, %c0_5] : memref<4x1xf32, #tpu.memory_space<vmem>>, vector<4x1xf32>
    %6 = vector.broadcast %5 : vector<4x1xf32> to vector<4x384xf32>
    %7 = arith.addf %4, %6 : vector<4x384xf32>
    %cst = arith.constant 0.000000e+00 : f32
    %8 = vector.broadcast %cst : f32 to vector<4x384xf32>
    %9 = arith.cmpf oge, %7, %8 : vector<4x384xf32>
    %cst_6 = arith.constant 0.00999999977 : f32
    %10 = vector.broadcast %cst_6 : f32 to vector<4x384xf32>
    %11 = arith.mulf %10, %7 : vector<4x384xf32>
    %12 = arith.select %9, %7, %11 : vector<4x384xi1>, vector<4x384xf32>
    %c0_7 = arith.constant 0 : index
    %c0_8 = arith.constant 0 : index
    %13 = vector.load %arg4[%c0_7, %c0_8] : memref<1x384xf32, #tpu.memory_space<vmem>>, vector<1x384xf32>
    %14 = vector.broadcast %13 : vector<1x384xf32> to vector<4x384xf32>
    %15 = arith.mulf %12, %14 : vector<4x384xf32>
    %16 = arith.truncf %15 : vector<4x384xf32> to vector<4x384xbf16>
    %17 = vector.extract_strided_slice %16 {offsets = [0, 0], sizes = [4, 365], strides = [1, 1]} : vector<4x384xbf16> to vector<4x365xbf16>
    %c0_9 = arith.constant 0 : index
    %c19 = arith.constant 19 : index
    %18 = vector.load %arg9[%c0_9, %c19] : memref<36x384xbf16, #tpu.memory_space<vmem>>, vector<4x365xbf16>
    tpu.vector_store %arg9[%c0_9, %c19], %17 {strides = array<i32>} : memref<36x384xbf16, #tpu.memory_space<vmem>>, vector<4x365xbf16>,
    %19 = vector.extract_strided_slice %16 {offsets = [0, 365], sizes = [4, 19], strides = [1, 1]} : vector<4x384xbf16> to vector<4x19xbf16>
    %c0_10 = arith.constant 0 : index
    %c0_11 = arith.constant 0 : index
    %20 = vector.load %arg9[%c0_10, %c0_11] : memref<36x384xbf16, #tpu.memory_space<vmem>>, vector<4x19xbf16>
    tpu.vector_store %arg9[%c0_10, %c0_11], %19 {strides = array<i32>} : memref<36x384xbf16, #tpu.memory_space<vmem>>, vector<4x19xbf16>,
    %21 = vector.extract_strided_slice %16 {offsets = [0, 0], sizes = [4, 366], strides = [1, 1]} : vector<4x384xbf16> to vector<4x366xbf16>
    %c4 = arith.constant 4 : index
    %c18 = arith.constant 18 : index
    %22 = vector.load %arg9[%c4, %c18] : memref<36x384xbf16, #tpu.memory_space<vmem>>, vector<4x366xbf16>
    tpu.vector_store %arg9[%c4, %c18], %21 {strides = array<i32>} : memref<36x384xbf16, #tpu.memory_space<vmem>>, vector<4x366xbf16>,
    %23 = vector.extract_strided_slice %16 {offsets = [0, 366], sizes = [4, 18], strides = [1, 1]} : vector<4x384xbf16> to vector<4x18xbf16>
    %c4_12 = arith.constant 4 : index
    %c0_13 = arith.constant 0 : index
    %24 = vector.load %arg9[%c4_12, %c0_13] : memref<36x384xbf16, #tpu.memory_space<vmem>>, vector<4x18xbf16>
    tpu.vector_store %arg9[%c4_12, %c0_13], %23 {strides = array<i32>} : memref<36x384xbf16, #tpu.memory_space<vmem>>, vector<4x18xbf16>,
    %25 = vector.extract_strided_slice %16 {offsets = [0, 0], sizes = [4, 367], strides = [1, 1]} : vector<4x384xbf16> to vector<4x367xbf16>
    %c8 = arith.constant 8 : index
    %c17 = arith.constant 17 : index
    %26 = vector.load %arg9[%c8, %c17] : memref<36x384xbf16, #tpu.memory_space<vmem>>, vector<4x367xbf16>
    tpu.vector_store %arg9[%c8, %c17], %25 {strides = array<i32>} : memref<36x384xbf16, #tpu.memory_space<vmem>>, vector<4x367xbf16>,
    %27 = vector.extract_strided_slice %16 {offsets = [0, 367], sizes = [4, 17], strides = [1, 1]} : vector<4x384xbf16> to vector<4x17xbf16>
    %c8_14 = arith.constant 8 : index
    %c0_15 = arith.constant 0 : index
    %28 = vector.load %arg9[%c8_14, %c0_15] : memref<36x384xbf16, #tpu.memory_space<vmem>>, vector<4x17xbf16>
    tpu.vector_store %arg9[%c8_14, %c0_15], %27 {strides = array<i32>} : memref<36x384xbf16, #tpu.memory_space<vmem>>, vector<4x17xbf16>,
    %29 = vector.extract_strided_slice %16 {offsets = [0, 0], sizes = [4, 383], strides = [1, 1]} : vector<4x384xbf16> to vector<4x383xbf16>
    %c12 = arith.constant 12 : index
    %c1 = arith.constant 1 : index
    %30 = vector.load %arg9[%c12, %c1] : memref<36x384xbf16, #tpu.memory_space<vmem>>, vector<4x383xbf16>
    tpu.vector_store %arg9[%c12, %c1], %29 {strides = array<i32>} : memref<36x384xbf16, #tpu.memory_space<vmem>>, vector<4x383xbf16>,
    %31 = vector.extract_strided_slice %16 {offsets = [0, 383], sizes = [4, 1], strides = [1, 1]} : vector<4x384xbf16> to vector<4x1xbf16>
    %c12_16 = arith.constant 12 : index
    %c0_17 = arith.constant 0 : index
    %32 = vector.load %arg9[%c12_16, %c0_17] : memref<36x384xbf16, #tpu.memory_space<vmem>>, vector<4x1xbf16>
    tpu.vector_store %arg9[%c12_16, %c0_17], %31 {strides = array<i32>} : memref<36x384xbf16, #tpu.memory_space<vmem>>, vector<4x1xbf16>,
    %c16 = arith.constant 16 : index
    %c0_18 = arith.constant 0 : index
    %33 = vector.load %arg9[%c16, %c0_18] : memref<36x384xbf16, #tpu.memory_space<vmem>>, vector<4x384xbf16>
    tpu.vector_store %arg9[%c16, %c0_18], %16 {strides = array<i32>} : memref<36x384xbf16, #tpu.memory_space<vmem>>, vector<4x384xbf16>,
    %34 = vector.extract_strided_slice %16 {offsets = [0, 1], sizes = [4, 383], strides = [1, 1]} : vector<4x384xbf16> to vector<4x383xbf16>
    %c20 = arith.constant 20 : index
    %c0_19 = arith.constant 0 : index
    %35 = vector.load %arg9[%c20, %c0_19] : memref<36x384xbf16, #tpu.memory_space<vmem>>, vector<4x383xbf16>
    tpu.vector_store %arg9[%c20, %c0_19], %34 {strides = array<i32>} : memref<36x384xbf16, #tpu.memory_space<vmem>>, vector<4x383xbf16>,
    %36 = vector.extract_strided_slice %16 {offsets = [0, 0], sizes = [4, 1], strides = [1, 1]} : vector<4x384xbf16> to vector<4x1xbf16>
    %c20_20 = arith.constant 20 : index
    %c383 = arith.constant 383 : index
    %37 = vector.load %arg9[%c20_20, %c383] : memref<36x384xbf16, #tpu.memory_space<vmem>>, vector<4x1xbf16>
    tpu.vector_store %arg9[%c20_20, %c383], %36 {strides = array<i32>} : memref<36x384xbf16, #tpu.memory_space<vmem>>, vector<4x1xbf16>,
    %38 = vector.extract_strided_slice %16 {offsets = [0, 17], sizes = [4, 367], strides = [1, 1]} : vector<4x384xbf16> to vector<4x367xbf16>
    %c24 = arith.constant 24 : index
    %c0_21 = arith.constant 0 : index
    %39 = vector.load %arg9[%c24, %c0_21] : memref<36x384xbf16, #tpu.memory_space<vmem>>, vector<4x367xbf16>
    tpu.vector_store %arg9[%c24, %c0_21], %38 {strides = array<i32>} : memref<36x384xbf16, #tpu.memory_space<vmem>>, vector<4x367xbf16>,
    %40 = vector.extract_strided_slice %16 {offsets = [0, 0], sizes = [4, 17], strides = [1, 1]} : vector<4x384xbf16> to vector<4x17xbf16>
    %c24_22 = arith.constant 24 : index
    %c367 = arith.constant 367 : index
    %41 = vector.load %arg9[%c24_22, %c367] : memref<36x384xbf16, #tpu.memory_space<vmem>>, vector<4x17xbf16>
    tpu.vector_store %arg9[%c24_22, %c367], %40 {strides = array<i32>} : memref<36x384xbf16, #tpu.memory_space<vmem>>, vector<4x17xbf16>,
    %42 = vector.extract_strided_slice %16 {offsets = [0, 18], sizes = [4, 366], strides = [1, 1]} : vector<4x384xbf16> to vector<4x366xbf16>
    %c28 = arith.constant 28 : index
    %c0_23 = arith.constant 0 : index
    %43 = vector.load %arg9[%c28, %c0_23] : memref<36x384xbf16, #tpu.memory_space<vmem>>, vector<4x366xbf16>
    tpu.vector_store %arg9[%c28, %c0_23], %42 {strides = array<i32>} : memref<36x384xbf16, #tpu.memory_space<vmem>>, vector<4x366xbf16>,
    %44 = vector.extract_strided_slice %16 {offsets = [0, 0], sizes = [4, 18], strides = [1, 1]} : vector<4x384xbf16> to vector<4x18xbf16>
    %c28_24 = arith.constant 28 : index
    %c366 = arith.constant 366 : index
    %45 = vector.load %arg9[%c28_24, %c366] : memref<36x384xbf16, #tpu.memory_space<vmem>>, vector<4x18xbf16>
    tpu.vector_store %arg9[%c28_24, %c366], %44 {strides = array<i32>} : memref<36x384xbf16, #tpu.memory_space<vmem>>, vector<4x18xbf16>,
    %46 = vector.extract_strided_slice %16 {offsets = [0, 19], sizes = [4, 365], strides = [1, 1]} : vector<4x384xbf16> to vector<4x365xbf16>
    %c32 = arith.constant 32 : index
    %c0_25 = arith.constant 0 : index
    %47 = vector.load %arg9[%c32, %c0_25] : memref<36x384xbf16, #tpu.memory_space<vmem>>, vector<4x365xbf16>
    tpu.vector_store %arg9[%c32, %c0_25], %46 {strides = array<i32>} : memref<36x384xbf16, #tpu.memory_space<vmem>>, vector<4x365xbf16>,
    %48 = vector.extract_strided_slice %16 {offsets = [0, 0], sizes = [4, 19], strides = [1, 1]} : vector<4x384xbf16> to vector<4x19xbf16>
    %c32_26 = arith.constant 32 : index
    %c365 = arith.constant 365 : index
    %49 = vector.load %arg9[%c32_26, %c365] : memref<36x384xbf16, #tpu.memory_space<vmem>>, vector<4x19xbf16>
    tpu.vector_store %arg9[%c32_26, %c365], %48 {strides = array<i32>} : memref<36x384xbf16, #tpu.memory_space<vmem>>, vector<4x19xbf16>,
    %c0_27 = arith.constant 0 : index
    %c0_28 = arith.constant 0 : index
    %50 = vector.load %arg5[%c0_27, %c0_28] : memref<8x36xbf16, #tpu.memory_space<vmem>>, vector<8x36xbf16>
    %c0_29 = arith.constant 0 : index
    %c0_30 = arith.constant 0 : index
    %51 = vector.load %arg9[%c0_29, %c0_30] : memref<36x384xbf16, #tpu.memory_space<vmem>>, vector<36x384xbf16>
    %cst_31 = arith.constant dense<0.000000e+00> : vector<8x384xf32>
    %52 = tpu.matmul %50, %51, %cst_31 {dimension_numbers = #tpu.dot_dimension_numbers<[1], [0], [0], [1], [0, 0, 1, 1], [], []>} : vector<8x36xbf16>, vector<36x384xbf16>, vector<8x384xf32> -> vector<8x384xf32>
    %c0_32 = arith.constant 0 : index
    %c0_33 = arith.constant 0 : index
    %c0_34 = arith.constant 0 : index
    %53 = vector.load %arg6[%c0_32, %c0_33, %c0_34] : memref<1x8x384xf32, #tpu.memory_space<vmem>>, vector<1x8x384xf32>
    %54 = vector.shape_cast %53 : vector<1x8x384xf32> to vector<8x384xf32>
    %55 = vector.shape_cast %52 : vector<8x384xf32> to vector<1x8x384xf32>
    tpu.vector_store %arg6[%c0_32, %c0_33, %c0_34], %55 {strides = array<i32>} : memref<1x8x384xf32, #tpu.memory_space<vmem>>, vector<1x8x384xf32>,
    %c0_35 = arith.constant 0 : index
    %c0_36 = arith.constant 0 : index
    %56 = vector.load %arg4[%c0_35, %c0_36] : memref<1x384xf32, #tpu.memory_space<vmem>>, vector<1x384xf32>
    %57 = vector.broadcast %56 : vector<1x384xf32> to vector<8x384xf32>
    %58 = arith.mulf %52, %57 : vector<8x384xf32>
    %cst_37 = arith.constant dense<0.000000e+00> : vector<8xf32>
    %59 = vector.multi_reduction <add>, %58, %cst_37 [1] : vector<8x384xf32> to vector<8xf32>
    %60 = vector.shape_cast %59 : vector<8xf32> to vector<8x1xf32>
    %c0_38 = arith.constant 0 : index
    %c0_39 = arith.constant 0 : index
    %c0_40 = arith.constant 0 : index
    %61 = vector.load %arg7[%c0_38, %c0_39, %c0_40] : memref<1x8x1xf32, #tpu.memory_space<vmem>>, vector<1x8x1xf32>
    %62 = vector.shape_cast %61 : vector<1x8x1xf32> to vector<8x1xf32>
    %63 = vector.shape_cast %60 : vector<8x1xf32> to vector<1x8x1xf32>
    tpu.vector_store %arg7[%c0_38, %c0_39, %c0_40], %63 {strides = array<i32>} : memref<1x8x1xf32, #tpu.memory_space<vmem>>, vector<1x8x1xf32>,
    %64 = arith.mulf %58, %52 : vector<8x384xf32>
    %cst_41 = arith.constant dense<0.000000e+00> : vector<8xf32>
    %65 = vector.multi_reduction <add>, %64, %cst_41 [1] : vector<8x384xf32> to vector<8xf32>
    %66 = vector.shape_cast %65 : vector<8xf32> to vector<8x1xf32>
    %c0_42 = arith.constant 0 : index
    %c0_43 = arith.constant 0 : index
    %c0_44 = arith.constant 0 : index
    %67 = vector.load %arg8[%c0_42, %c0_43, %c0_44] : memref<1x8x1xf32, #tpu.memory_space<vmem>>, vector<1x8x1xf32>
    %68 = vector.shape_cast %67 : vector<1x8x1xf32> to vector<8x1xf32>
    %69 = vector.shape_cast %66 : vector<8x1xf32> to vector<1x8x1xf32>
    tpu.vector_store %arg8[%c0_42, %c0_43, %c0_44], %69 {strides = array<i32>} : memref<1x8x1xf32, #tpu.memory_space<vmem>>, vector<1x8x1xf32>,
    return
  }
  func.func @transform_0(%arg0: i32) -> (i32, i32, i32) {
    %c0_i32 = arith.constant 0 : i32
    %c0_i32_0 = arith.constant 0 : i32
    %c0_i32_1 = arith.constant 0 : i32
    return %arg0, %c0_i32, %c0_i32_0 : i32, i32, i32
  }
  func.func @transform_1(%arg0: i32) -> (i32, i32) {
    %c0_i32 = arith.constant 0 : i32
    %c0_i32_0 = arith.constant 0 : i32
    %c0_i32_1 = arith.constant 0 : i32
    return %c0_i32, %c0_i32_0 : i32, i32
  }
  func.func @transform_2(%arg0: i32) -> (i32, i32) {
    %c0_i32 = arith.constant 0 : i32
    %c0_i32_0 = arith.constant 0 : i32
    %c0_i32_1 = arith.constant 0 : i32
    return %c0_i32, %c0_i32_0 : i32, i32
  }
  func.func @transform_3(%arg0: i32) -> (i32, i32) {
    %c0_i32 = arith.constant 0 : i32
    %c0_i32_0 = arith.constant 0 : i32
    %c0_i32_1 = arith.constant 0 : i32
    return %c0_i32, %c0_i32_0 : i32, i32
  }
  func.func @transform_4(%arg0: i32) -> (i32, i32) {
    %c0_i32 = arith.constant 0 : i32
    %c0_i32_0 = arith.constant 0 : i32
    %c0_i32_1 = arith.constant 0 : i32
    return %c0_i32, %c0_i32_0 : i32, i32
  }
  func.func @transform_5(%arg0: i32) -> (i32, i32, i32) {
    %c0_i32 = arith.constant 0 : i32
    %c0_i32_0 = arith.constant 0 : i32
    %c0_i32_1 = arith.constant 0 : i32
    return %arg0, %c0_i32, %c0_i32_0 : i32, i32, i32
  }
  func.func @transform_6(%arg0: i32) -> (i32, i32, i32) {
    %c0_i32 = arith.constant 0 : i32
    %c0_i32_0 = arith.constant 0 : i32
    %c0_i32_1 = arith.constant 0 : i32
    return %arg0, %c0_i32, %c0_i32_0 : i32, i32, i32
  }
  func.func @transform_7(%arg0: i32) -> (i32, i32, i32) {
    %c0_i32 = arith.constant 0 : i32
    %c0_i32_0 = arith.constant 0 : i32
    %c0_i32_1 = arith.constant 0 : i32
    return %arg0, %c0_i32, %c0_i32_0 : i32, i32, i32
  }
}

</mosaic_0001>

<llo_original>
// kernel: tpu_custom_call.1
$region0: #{tpu_custom_call.1}
  #allocation0 [shape = 'u32[]', space=smem, size = 0x4, offset = 0x4, fixed_abs, tag = 'smem constant byte address 0x4 - core index']
  #allocation1 [shape = 'u32[144,128]{1,0:T(1,128)}', space=vmem, size = 0x12000, scoped, tag = 'internal scratch']
  #allocation2 [shape = 'bf16[36,384]{1,0:T(8,128)(2,1)}', space=vmem, size = 0x7800, scoped, tag = 'scratch operand']
  %s0 = inlined_call_operand.hbm [shape: f32[2,4,384], index: 0, kind: input, shape index: {}]
  %s1 = inlined_call_operand.vmem [shape: f32[4,1], index: 1, kind: input, shape index: {}]
  %s2 = inlined_call_operand.vmem [shape: f32[4,1], index: 2, kind: input, shape index: {}]
  %s3 = inlined_call_operand.vmem [shape: f32[1,384], index: 3, kind: input, shape index: {}]
  %s4 = inlined_call_operand.vmem [shape: bf16[8,36], index: 4, kind: input, shape index: {}]
  %s5 = inlined_call_operand.hbm [shape: f32[2,8,384], index: 5, kind: output, shape index: {0}]
  %s6 = inlined_call_operand.vmem [shape: f32[2,8,1], index: 6, kind: output, shape index: {1}]
  %s7 = inlined_call_operand.vmem [shape: f32[2,8,1], index: 7, kind: output, shape index: {2}]
  %8 = xla_tuple %s5, %s6, %s7
  %s9 = sld [smem:[#allocation0]]
  $region73: #{tpu_custom_call.1} parent=0
    _
  %s11 = ssub.s32 1, %s9
  %s12 = scalar_select 0, %s11, %s9
  $region1: #{tpu_custom_call.1} parent=0
    #allocation3 [shape = 'u8[12288]{0}', space=vmem, size = 0x3000, scoped, tag = 'input window, operand 0']
    #allocation4 [shape = 's32[2]{0}', space=sflag, size = 0x8, scoped, tag = 'scoped memory for tpu_custom_call.1']
    #allocation5 [shape = 's32[2]{0}', space=sflag, size = 0x8, scoped, tag = 'scoped memory for tpu_custom_call.1']
    #allocation6 [shape = 'u8[24576]{0}', space=vmem, size = 0x6000, scoped, tag = 'output window, operand 0']
    %13 = vsyncpa [#allocation4], 0
    %s14 = scalar_lea.sflag [#allocation4], 1
    %15 = vsyncpa %s14, 0
    %16 = vsyncpa [#allocation5], 0
    %s17 = scalar_lea.sflag [#allocation5], 1
    %18 = vsyncpa %s17, 0
    loop: start=0, step=1, limit=4
    $region2: #{tpu_custom_call.1} parent=1 // loop_pre_header
      _
    $region3: #{tpu_custom_call.1} parent=1 // loop_header
      %s20 = sphi 0, %s24
      %p21 = scmp.ge.s32.totalorder %s20, 4
      %s30 = sphi 0, %s32
      %s33 = sphi 0, %s30
      %s34 = sphi 0, %s33
      %s50 = sphi 0, %s34
      %s54 = sphi 0, %s54
      %s56 = sphi 0, %s54
      %s57 = sphi 0, %s56
      %s71 = sphi 0, %s57
      %s75 = sphi 0, %s75
      %s77 = sphi 0, %s75
      %s78 = sphi 0, %s77
      %s92 = sphi 0, %s78
      %s96 = sphi 0, %s96
      %s98 = sphi 0, %s96
      %s99 = sphi 0, %s98
      %s113 = sphi 0, %s99
      %s117 = sphi 0, %s117
      %s119 = sphi 0, %s117
      %s120 = sphi 0, %s119
      %s134 = sphi 0, %s120
      %s140 = sphi 0, %s142
      %s143 = sphi 0, %s140
      %s144 = sphi 0, %s143
      %s160 = sphi 0, %s144
      %s166 = sphi 0, %s168
      %s169 = sphi 0, %s166
      %s170 = sphi 0, %s169
      %s186 = sphi 0, %s170
      %s192 = sphi 0, %s194
      %s195 = sphi 0, %s192
      %s196 = sphi 0, %s195
      %s212 = sphi 0, %s196
    $region4: #{tpu_custom_call.1} parent=1 // loop_header_branch
      %23 = sbr.rel (%p21) target = $region8
    $region5: #{tpu_custom_call.1} parent=1 // loop_body
      %s25 = ssub.s32 %s20, 1
      %s26 = ssub.s32 %s20, 2
      %s27 = sadd.s32 %s20, 1
      %s28 = ssub.s32 %s20, %s27
      %p29 = scmp.eq.s32.totalorder %s28, 0
      %s31 = sadd.s32 %s30, 1
      %s32 = scalar_select %p29, %s30, %s31
      %p35 = pneg %p29
      %p36 = scmp.eq.s32.totalorder %s20, 1
      %p37 = por %p35, %p36
      %p38 = scmp.ne.s32.totalorder %s30, %s33
      %p39 = scmp.eq.s32.totalorder %s20, 0
      %p40 = por %p38, %p39
      %p41 = scmp.ne.s32.totalorder %s30, %s33
      %p42 = scmp.eq.s32.totalorder %s25, 1
      %p43 = por %p41, %p42
      %p44 = scmp.ne.s32.totalorder %s33, %s34
      %p45 = scmp.eq.s32.totalorder %s25, 0
      %p46 = por %p44, %p45
      %p47 = scmp.ne.s32.totalorder %s33, %s34
      %p48 = scmp.eq.s32.totalorder %s26, 1
      %p49 = por %p47, %p48
      %p51 = scmp.ne.s32.totalorder %s34, %s50
      %p52 = scmp.eq.s32.totalorder %s26, 0
      %p53 = por %p51, %p52
      %s55 = sadd.s32 %s54, 1
      %p58 = scmp.eq.s32.totalorder %s20, 1
      %p59 = scmp.ne.s32.totalorder %s54, %s56
      %p60 = scmp.eq.s32.totalorder %s20, 0
      %p61 = por %p59, %p60
      %p62 = scmp.ne.s32.totalorder %s54, %s56
      %p63 = scmp.eq.s32.totalorder %s25, 1
      %p64 = por %p62, %p63
      %p65 = scmp.ne.s32.totalorder %s56, %s57
      %p66 = scmp.eq.s32.totalorder %s25, 0
      %p67 = por %p65, %p66
      %p68 = scmp.ne.s32.totalorder %s56, %s57
      %p69 = scmp.eq.s32.totalorder %s26, 1
      %p70 = por %p68, %p69
      %p72 = scmp.ne.s32.totalorder %s57, %s71
      %p73 = scmp.eq.s32.totalorder %s26, 0
      %p74 = por %p72, %p73
      %s76 = sadd.s32 %s75, 1
      %p79 = scmp.eq.s32.totalorder %s20, 1
      %p80 = scmp.ne.s32.totalorder %s75, %s77
      %p81 = scmp.eq.s32.totalorder %s20, 0
      %p82 = por %p80, %p81
      %p83 = scmp.ne.s32.totalorder %s75, %s77
      %p84 = scmp.eq.s32.totalorder %s25, 1
      %p85 = por %p83, %p84
      %p86 = scmp.ne.s32.totalorder %s77, %s78
      %p87 = scmp.eq.s32.totalorder %s25, 0
      %p88 = por %p86, %p87
      %p89 = scmp.ne.s32.totalorder %s77, %s78
      %p90 = scmp.eq.s32.totalorder %s26, 1
      %p91 = por %p89, %p90
      %p93 = scmp.ne.s32.totalorder %s78, %s92
      %p94 = scmp.eq.s32.totalorder %s26, 0
      %p95 = por %p93, %p94
      %s97 = sadd.s32 %s96, 1
      %p100 = scmp.eq.s32.totalorder %s20, 1
      %p101 = scmp.ne.s32.totalorder %s96, %s98
      %p102 = scmp.eq.s32.totalorder %s20, 0
      %p103 = por %p101, %p102
      %p104 = scmp.ne.s32.totalorder %s96, %s98
      %p105 = scmp.eq.s32.totalorder %s25, 1
      %p106 = por %p104, %p105
      %p107 = scmp.ne.s32.totalorder %s98, %s99
      %p108 = scmp.eq.s32.totalorder %s25, 0
      %p109 = por %p107, %p108
      %p110 = scmp.ne.s32.totalorder %s98, %s99
      %p111 = scmp.eq.s32.totalorder %s26, 1
      %p112 = por %p110, %p111
      %p114 = scmp.ne.s32.totalorder %s99, %s113
      %p115 = scmp.eq.s32.totalorder %s26, 0
      %p116 = por %p114, %p115
      %s118 = sadd.s32 %s117, 1
      %p121 = scmp.eq.s32.totalorder %s20, 1
      %p122 = scmp.ne.s32.totalorder %s117, %s119
      %p123 = scmp.eq.s32.totalorder %s20, 0
      %p124 = por %p122, %p123
      %p125 = scmp.ne.s32.totalorder %s117, %s119
      %p126 = scmp.eq.s32.totalorder %s25, 1
      %p127 = por %p125, %p126
      %p128 = scmp.ne.s32.totalorder %s119, %s120
      %p129 = scmp.eq.s32.totalorder %s25, 0
      %p130 = por %p128, %p129
      %p131 = scmp.ne.s32.totalorder %s119, %s120
      %p132 = scmp.eq.s32.totalorder %s26, 1
      %p133 = por %p131, %p132
      %p135 = scmp.ne.s32.totalorder %s120, %s134
      %p136 = scmp.eq.s32.totalorder %s26, 0
      %p137 = por %p135, %p136
      %s138 = ssub.s32 %s20, %s27
      %p139 = scmp.eq.s32.totalorder %s138, 0
      %s141 = sadd.s32 %s140, 1
      %s142 = scalar_select %p139, %s140, %s141
      %p145 = pneg %p139
      %p146 = scmp.eq.s32.totalorder %s20, 1
      %p147 = por %p145, %p146
      %p148 = scmp.ne.s32.totalorder %s140, %s143
      %p149 = scmp.eq.s32.totalorder %s20, 0
      %p150 = por %p148, %p149
      %p151 = scmp.ne.s32.totalorder %s140, %s143
      %p152 = scmp.eq.s32.totalorder %s25, 1
      %p153 = por %p151, %p152
      %p154 = scmp.ne.s32.totalorder %s143, %s144
      %p155 = scmp.eq.s32.totalorder %s25, 0
      %p156 = por %p154, %p155
      %p157 = scmp.ne.s32.totalorder %s143, %s144
      %p158 = scmp.eq.s32.totalorder %s26, 1
      %p159 = por %p157, %p158
      %p161 = scmp.ne.s32.totalorder %s144, %s160
      %p162 = scmp.eq.s32.totalorder %s26, 0
      %p163 = por %p161, %p162
      %s164 = ssub.s32 %s20, %s27
      %p165 = scmp.eq.s32.totalorder %s164, 0
      %s167 = sadd.s32 %s166, 1
      %s168 = scalar_select %p165, %s166, %s167
      %p171 = pneg %p165
      %p172 = scmp.eq.s32.totalorder %s20, 1
      %p173 = por %p171, %p172
      %p174 = scmp.ne.s32.totalorder %s166, %s169
      %p175 = scmp.eq.s32.totalorder %s20, 0
      %p176 = por %p174, %p175
      %p177 = scmp.ne.s32.totalorder %s166, %s169
      %p178 = scmp.eq.s32.totalorder %s25, 1
      %p179 = por %p177, %p178
      %p180 = scmp.ne.s32.totalorder %s169, %s170
      %p181 = scmp.eq.s32.totalorder %s25, 0
      %p182 = por %p180, %p181
      %p183 = scmp.ne.s32.totalorder %s169, %s170
      %p184 = scmp.eq.s32.totalorder %s26, 1
      %p185 = por %p183, %p184
      %p187 = scmp.ne.s32.totalorder %s170, %s186
      %p188 = scmp.eq.s32.totalorder %s26, 0
      %p189 = por %p187, %p188
      %s190 = ssub.s32 %s20, %s27
      %p191 = scmp.eq.s32.totalorder %s190, 0
      %s193 = sadd.s32 %s192, 1
      %s194 = scalar_select %p191, %s192, %s193
      %p197 = pneg %p191
      %p198 = scmp.eq.s32.totalorder %s20, 1
      %p199 = por %p197, %p198
      %p200 = scmp.ne.s32.totalorder %s192, %s195
      %p201 = scmp.eq.s32.totalorder %s20, 0
      %p202 = por %p200, %p201
      %p203 = scmp.ne.s32.totalorder %s192, %s195
      %p204 = scmp.eq.s32.totalorder %s25, 1
      %p205 = por %p203, %p204
      %p206 = scmp.ne.s32.totalorder %s195, %s196
      %p207 = scmp.eq.s32.totalorder %s25, 0
      %p208 = por %p206, %p207
      %p209 = scmp.ne.s32.totalorder %s195, %s196
      %p210 = scmp.eq.s32.totalorder %s26, 1
      %p211 = por %p209, %p210
      %p213 = scmp.ne.s32.totalorder %s196, %s212
      %p214 = scmp.eq.s32.totalorder %s26, 0
      %p215 = por %p213, %p214
      %p216 = scmp.le.s32.totalorder 1, %s20
      %p217 = scmp.lt.s32.totalorder %s20, 3
      %p218 = pnand %p216, %p217
      %p219 = pneg %p218
      // Predicated region
      $region9: #{tpu_custom_call.1} parent=5 // pred_check
        _
      $region10: #{tpu_custom_call.1} parent=5 // pred_check_branch
        %221 = sbr.rel (%p218) target = $region12
      $region11: #{tpu_custom_call.1} parent=5 // pred_region
        %s222 = ssub.s32 %s20, 1
        // Predicated region
        $region13: #{tpu_custom_call.1} parent=11 // pred_check
          %p223 = pneg %p67
        $region14: #{tpu_custom_call.1} parent=11 // pred_check_branch
          %225 = sbr.rel (%p223) target = $region16
        $region15: #{tpu_custom_call.1} parent=11 // pred_region
          _
        $region16: #{tpu_custom_call.1} parent=11 // pred_fallthru
          _
        // Predicated region
        $region17: #{tpu_custom_call.1} parent=11 // pred_check
          %p226 = pneg %p88
        $region18: #{tpu_custom_call.1} parent=11 // pred_check_branch
          %228 = sbr.rel (%p226) target = $region20
        $region19: #{tpu_custom_call.1} parent=11 // pred_region
          _
        $region20: #{tpu_custom_call.1} parent=11 // pred_fallthru
          _
        // Predicated region
        $region21: #{tpu_custom_call.1} parent=11 // pred_check
          %p229 = pneg %p109
        $region22: #{tpu_custom_call.1} parent=11 // pred_check_branch
          %231 = sbr.rel (%p229) target = $region24
        $region23: #{tpu_custom_call.1} parent=11 // pred_region
          _
        $region24: #{tpu_custom_call.1} parent=11 // pred_fallthru
          _
        // Predicated region
        $region25: #{tpu_custom_call.1} parent=11 // pred_check
          %p232 = pneg %p130
        $region26: #{tpu_custom_call.1} parent=11 // pred_check_branch
          %234 = sbr.rel (%p232) target = $region28
        $region27: #{tpu_custom_call.1} parent=11 // pred_region
          _
        $region28: #{tpu_custom_call.1} parent=11 // pred_fallthru
          _
      $region12: #{tpu_custom_call.1} parent=5 // pred_fallthru
        _
      %p235 = scmp.lt.s32.totalorder %s20, 2
      // Predicated region
      $region29: #{tpu_custom_call.1} parent=5 // pred_check
        %p236 = pneg %p235
      $region30: #{tpu_custom_call.1} parent=5 // pred_check_branch
        %238 = sbr.rel (%p236) target = $region32
      $region31: #{tpu_custom_call.1} parent=5 // pred_region
        // Predicated region
        $region33: #{tpu_custom_call.1} parent=31 // pred_check
          %p239 = pneg %p40
        $region34: #{tpu_custom_call.1} parent=31 // pred_check_branch
          %241 = sbr.rel (%p239) target = $region36
        $region35: #{tpu_custom_call.1} parent=31 // pred_region
          %s242 = sand.u32 %s30, 1
          %s243 = scalar_lea.sflag [#allocation4], %s242
          %s244 = sand.u32 %s30, 1
          %s245 = smul.addr %s244, 12
          %s246 = scalar_lea.vmem [#allocation3], %s245
          %s248 = ssub.s32 192, 192
          %249 = vsyncadd %s243, %s248
          %s250 = smul.addr %s20, 3
          %s251 = smul.addr %s250, 64
          %s252 = scalar_lea.hbm %s0, %s251
          %s254 = sshll.u32 %s246, 4
          %s255 = int_to_ptr.vmem [resolvable:$true] %s254
          %257 = dma.hbm_to_vmem [thread:$0]  %s252, 192, %s255, %s243
        $region36: #{tpu_custom_call.1} parent=31 // pred_fallthru
          _
      $region32: #{tpu_custom_call.1} parent=5 // pred_fallthru
        _
      %p258 = scmp.le.s32.totalorder 1, %s20
      %p259 = scmp.lt.s32.totalorder %s20, 3
      %p260 = pnand %p258, %p259
      %p261 = pneg %p260
      // Predicated region
      $region37: #{tpu_custom_call.1} parent=5 // pred_check
        _
      $region38: #{tpu_custom_call.1} parent=5 // pred_check_branch
        %263 = sbr.rel (%p260) target = $region40
      $region39: #{tpu_custom_call.1} parent=5 // pred_region
        %s264 = ssub.s32 %s20, 1
        %s265 = sand.u32 %s33, 1
        %s266 = scalar_lea.sflag [#allocation4], %s265
        %s267 = sand.u32 %s33, 1
        %s268 = smul.addr %s267, 12
        %s269 = scalar_lea.vmem [#allocation3], %s268
        // Predicated region
        $region41: #{tpu_custom_call.1} parent=39 // pred_check
          %p270 = pneg %p46
        $region42: #{tpu_custom_call.1} parent=39 // pred_check_branch
          %272 = sbr.rel (%p270) target = $region44
        $region43: #{tpu_custom_call.1} parent=39 // pred_region
          %273 = dma.done %s266, 192
        $region44: #{tpu_custom_call.1} parent=39 // pred_fallthru
          _
        %s274 = sand.u32 %s33, 1
        %s275 = scalar_lea.sflag [#allocation4], %s274
        %s276 = sand.u32 %s33, 1
        %s277 = smul.addr %s276, 12
        %s278 = scalar_lea.vmem [#allocation3], %s277
        %p279 = pneg %p46
        %p280 = pneg %p43
        %p281 = pneg %p67
        %p282 = pneg %p64
        %p283 = pneg %p88
        %p284 = pneg %p85
        %p285 = pneg %p109
        %p286 = pneg %p106
        %p287 = pneg %p130
        %p288 = pneg %p127
        %p289 = pneg %p156
        %p290 = pneg %p153
        %s291 = sand.u32 %s143, 1
        %s292 = scalar_lea.sflag [#allocation5], %s291
        %s293 = sand.u32 %s143, 1
        %s294 = smul.addr %s293, 24
        %s295 = scalar_lea.vmem [#allocation6], %s294
        %p296 = pneg %p182
        %p297 = pneg %p179
        %p298 = scmp.lt.s32.totalorder %s25, 1
        %s299 = scalar_select %p298, %s25, 1
        %s300 = smul.addr %s299, 8
        %s301 = scalar_lea.vmem %s6, %s300
        %p302 = pneg %p208
        %p303 = pneg %p205
        %p304 = scmp.lt.s32.totalorder %s25, 1
        %s305 = scalar_select %p304, %s25, 1
        %s306 = smul.addr %s305, 8
        %s307 = scalar_lea.vmem %s7, %s306
        %p308 = scmp.lt.s32.totalorder %s25, 1
        %s309 = scalar_select %p308, %s25, 1
        %s310 = smul.addr %s309, 8
        %s311 = scalar_lea.vmem %s6, %s310
        %p312 = scmp.lt.s32.totalorder %s25, 1
        %s313 = scalar_select %p312, %s25, 1
        %s314 = smul.addr %s313, 8
        %s315 = scalar_lea.vmem %s7, %s314
        %v317 = vld [vmem:[%s269] sm:$0xff]
        %v318 = vld [vmem:[%s269 + $0x8] sm:$0xf]
        %v319 = vld [vmem:[%s1] sm:$0xf]
        %321 = vset.pattern.permute.xlu0 0
        %322 = vperm.xlu0 %321, %v319
        %v323 = vpop.permute.xlu0 %322
        %v325 = vunpack.c.l.s4 839922192
        %v326 = vunpack.c.0.s8 %v325
        %v327 = vlaneseq
        %v328 = vshrl.u32 %v327, 7
        %v329 = vsub.s32 %v326, %v328
        %v330 = vrot.slane %v323, %v329
        %v332 = vmul.f32 %v317, %v330
        %v333 = vmul.f32 %v318, %v330
        %v334 = vld [vmem:[%s2] sm:$0xf]
        %336 = vset.pattern.permute.xlu0 0
        %337 = vperm.xlu0 %336, %v334
        %v338 = vpop.permute.xlu0 %337
        %v340 = vunpack.c.l.s4 839922192
        %v341 = vunpack.c.0.s8 %v340
        %v342 = vlaneseq
        %v343 = vshrl.u32 %v342, 7
        %v344 = vsub.s32 %v341, %v343
        %v345 = vrot.slane %v338, %v344
        %v347 = vadd.f32 %v332, %v345
        %v348 = vadd.f32 %v333, %v345
        %vm349 = vcmp.ge.f32.partialorder %v347, 0.0
        %vm350 = vcmp.ge.f32.partialorder %v348, 0.0
        %v351 = vmul.f32 %v347, 0.01
        %v352 = vmul.f32 %v348, 0.01
        %v353 = vsel %vm349, %v347, %v351
        %v354 = vsel %vm350, %v348, %v352
        %v355 = vld [vmem:[%s3] sm:$0x7]
        %v357 = vlaneseq
        %v358 = vshrl.u32 %v357, 7
        %v359 = vsub.s32 0, %v358
        %v360 = vrot.slane %v355, %v359
        %v361 = vlaneseq
        %v362 = vshrl.u32 %v361, 7
        %v363 = vsub.s32 1, %v362
        %v364 = vrot.slane %v355, %v363
        %v365 = vlaneseq
        %v366 = vshrl.u32 %v365, 7
        %v367 = vsub.s32 2, %v366
        %v368 = vrot.slane %v355, %v367
        %v370 = vcombine.low %v360, %v364
        %v372 = vmul.f32 %v353, %v370
        %v373 = vmul.f32 %v354, %v368
        %v375 = vcombine.high %v372, %v372
        %v377 = vpack.c.bf16 %v372, %v372
        %v378 = vpack.c.bf16 %v375, %v375
        %v379 = vpack.c.bf16 %v373, %v373
        %v383 = vunpack.c.l.b16 %v377
        %v384 = vunpack.c.l.b16 %v378
        %v385 = vunpack.c.l.b16 %v379
        %v386 = vpack.c.b16 %v384, %v383
        %v387 = vpack.c.b16 %v385, %v385
        %388 = vrot.lane.b32.xlu0 %v386, 19
        %v389 = vpop.permute.xlu0 %388
        %390 = vrot.lane.b32.xlu0 %v387, 19
        %v391 = vpop.permute.xlu0 %390
        %v392 = vrot.slane %v389, 4
        %vm393 = vcmask 154624
        %v394 = vsel %vm393, %v392, %v389
        %v395 = vsel %vm393, %v392, %v391
        %vm398 = vcmask 1041560
        %vm399 = vcmask 1045508
        %vm400 = vmor %vm399, %vm398
        %401 = vst.msk [vmem:[#allocation2] sm:$0x33] %vm400, %v394
        %402 = vst [vmem:[#allocation2 + $0x8] sm:$0x3] %v395
        %vm404 = vcmask 148480
        %405 = vst.msk [vmem:[#allocation2] sm:$0x3] %vm404, %v391
        %v406 = vrot.slane %v386, 6
        %v407 = vrot.slane %v387, 6
        %408 = vrot.lane.b32.xlu0 %v406, 18
        %v409 = vpop.permute.xlu0 %408
        %410 = vrot.lane.b32.xlu0 %v407, 18
        %v411 = vpop.permute.xlu0 %410
        %v412 = vrot.slane %v409, 4
        %vm413 = vcmask 146432
        %v414 = vsel %vm413, %v412, %v409
        %v415 = vsel %vm413, %v412, %v411
        %vm418 = vcmask 1043602
        %vm419 = vcmask 1047558
        %vm420 = vmor %vm419, %vm418
        %421 = vst.msk [vmem:[#allocation2] sm:$0xcc] %vm420, %v414
        %422 = vst [vmem:[#allocation2 + $0x8] sm:$0xc] %v415
        %vm424 = vcmask 142338
        %425 = vst.msk [vmem:[#allocation2] sm:$0xc] %vm424, %v411
        %426 = vrot.lane.b32.xlu0 %v386, 17
        %v427 = vpop.permute.xlu0 %426
        %428 = vrot.lane.b32.xlu0 %v387, 17
        %v429 = vpop.permute.xlu0 %428
        %v430 = vrot.slane %v427, 4
        %vm431 = vcmask 138240
        %v432 = vsel %vm431, %v430, %v427
        %v433 = vsel %vm431, %v430, %v429
        %vm436 = vcmask 1041544
        %vm437 = vmor %vm399, %vm436
        %438 = vst.msk [vmem:[#allocation2 + $0xc] sm:$0x33] %vm437, %v432
        %439 = vst [vmem:[#allocation2 + $0x14] sm:$0x3] %v433
        %vm441 = vcmask 132096
        %442 = vst.msk [vmem:[#allocation2 + $0xc] sm:$0x3] %vm441, %v429
        %443 = vrot.lane.b32.xlu0 %v406, 1
        %v444 = vpop.permute.xlu0 %443
        %445 = vrot.lane.b32.xlu0 %v407, 1
        %v446 = vpop.permute.xlu0 %445
        %v447 = vrot.slane %v444, 4
        %vm448 = vcmask 7168
        %v449 = vsel %vm448, %v447, %v444
        %v450 = vsel %vm448, %v447, %v446
        %vm453 = vcmask 1043466
        %vm454 = vmor %vm419, %vm453
        %455 = vst.msk [vmem:[#allocation2 + $0xc] sm:$0xcc] %vm454, %v449
        %456 = vst [vmem:[#allocation2 + $0x14] sm:$0xc] %v450
        %vm458 = vcmask 3074
        %459 = vst.msk [vmem:[#allocation2 + $0xc] sm:$0xc] %vm458, %v446
        %462 = vst [vmem:[#allocation2 + $0x18] sm:$0x33] %v386
        %463 = vst [vmem:[#allocation2 + $0x20] sm:$0x3] %v387
        %464 = vrot.lane.b32.xlu0 %v406, 127
        %v465 = vpop.permute.xlu0 %464
        %466 = vrot.lane.b32.xlu0 %v407, 127
        %v467 = vpop.permute.xlu0 %466
        %v468 = vrot.slane %v465, 4
        %v469 = vrot.slane %v467, 4
        %vm470 = vcmask 1043456
        %v471 = vsel %vm470, %v468, %v469
        %vm472 = vcmask 1039360
        %v473 = vsel %vm472, %v465, %v471
        %476 = vst [vmem:[#allocation2 + $0x18] sm:$0xcc] %v473
        %vm477 = vcmask 1035266
        %478 = vst.msk [vmem:[#allocation2 + $0x20] sm:$0xc] %vm477, %v467
        %v479 = vpack.c.b16 %v383, %v383
        %v480 = vrot.slane %v479, 6
        %481 = vrot.lane.b32.xlu0 %v480, 127
        %v482 = vpop.permute.xlu0 %481
        %vm484 = vcmask 1044474
        %485 = vst.msk [vmem:[#allocation2 + $0x20] sm:$0xc] %vm484, %v482
        %486 = vrot.lane.b32.xlu0 %v386, 111
        %v487 = vpop.permute.xlu0 %486
        %488 = vrot.lane.b32.xlu0 %v387, 111
        %v489 = vpop.permute.xlu0 %488
        %v490 = vrot.slane %v487, 4
        %v491 = vrot.slane %v489, 4
        %v492 = vsel %vm470, %v490, %v491
        %vm493 = vcmask 908288
        %v494 = vsel %vm493, %v487, %v492
        %497 = vst [vmem:[#allocation2 + $0x24] sm:$0x33] %v494
        %vm498 = vcmask 902144
        %499 = vst.msk [vmem:[#allocation2 + $0x2c] sm:$0x3] %vm498, %v489
        %500 = vrot.lane.b32.xlu0 %v479, 111
        %v501 = vpop.permute.xlu0 %500
        %vm503 = vcmask 1042296
        %504 = vst.msk [vmem:[#allocation2 + $0x2c] sm:$0x3] %vm503, %v501
        %505 = vrot.lane.b32.xlu0 %v406, 110
        %v506 = vpop.permute.xlu0 %505
        %507 = vrot.lane.b32.xlu0 %v407, 110
        %v508 = vpop.permute.xlu0 %507
        %v509 = vrot.slane %v506, 4
        %v510 = vrot.slane %v508, 4
        %v511 = vsel %vm470, %v509, %v510
        %vm512 = vcmask 900096
        %v513 = vsel %vm512, %v506, %v511
        %516 = vst [vmem:[#allocation2 + $0x24] sm:$0xcc] %v513
        %vm517 = vcmask 896002
        %518 = vst.msk [vmem:[#allocation2 + $0x2c] sm:$0xc] %vm517, %v508
        %519 = vrot.lane.b32.xlu0 %v480, 110
        %v520 = vpop.permute.xlu0 %519
        %vm522 = vcmask 1044338
        %523 = vst.msk [vmem:[#allocation2 + $0x2c] sm:$0xc] %vm522, %v520
        %524 = vrot.lane.b32.xlu0 %v386, 109
        %v525 = vpop.permute.xlu0 %524
        %526 = vrot.lane.b32.xlu0 %v387, 109
        %v527 = vpop.permute.xlu0 %526
        %v528 = vrot.slane %v525, 4
        %v529 = vrot.slane %v527, 4
        %v530 = vsel %vm470, %v528, %v529
        %vm531 = vcmask 891904
        %v532 = vsel %vm531, %v525, %v530
        %535 = vst [vmem:[#allocation2 + $0x30] sm:$0x33] %v532
        %vm536 = vcmask 885760
        %537 = vst.msk [vmem:[#allocation2 + $0x38] sm:$0x3] %vm536, %v527
        %538 = vrot.lane.b32.xlu0 %v479, 109
        %v539 = vpop.permute.xlu0 %538
        %vm541 = vcmask 1042280
        %542 = vst.msk [vmem:[#allocation2 + $0x38] sm:$0x3] %vm541, %v539
        %v543 = vld [vmem:[%s4] sm:$0xf]
        %v544 = vld [vmem:[#allocation2] sm:$0xff]
        %v545 = vld [vmem:[#allocation2 + $0x8] sm:$0xf]
        %v546 = vld [vmem:[#allocation2 + $0xc] sm:$0xff]
        %v547 = vld [vmem:[#allocation2 + $0x14] sm:$0xf]
        %v548 = vld [vmem:[#allocation2 + $0x18] sm:$0xff]
        %v549 = vld [vmem:[#allocation2 + $0x20] sm:$0xf]
        %v550 = vld [vmem:[#allocation2 + $0x24] sm:$0xff]
        %v551 = vld [vmem:[#allocation2 + $0x2c] sm:$0xf]
        %v552 = vld [vmem:[#allocation2 + $0x30] sm:$0x33]
        %v553 = vld [vmem:[#allocation2 + $0x38] sm:$0x3]
        %v564 = vunpack.c.l.b16 %v544
        %v565 = vunpack.c.h.b16 %v544
        %v566 = vunpack.c.l.b16 %v545
        %v567 = vunpack.c.l.b16 %v546
        %v568 = vunpack.c.h.b16 %v546
        %v569 = vunpack.c.l.b16 %v547
        %v570 = vunpack.c.l.b16 %v548
        %v571 = vunpack.c.h.b16 %v548
        %v572 = vunpack.c.l.b16 %v549
        %v573 = vunpack.c.l.b16 %v550
        %v574 = vunpack.c.h.b16 %v550
        %v575 = vunpack.c.l.b16 %v551
        %v576 = vunpack.c.l.b16 %v552
        %v577 = vunpack.c.h.b16 %v552
        %v578 = vunpack.c.l.b16 %v553
        %v579 = vpack.c.b16 %v567, %v564
        %v580 = vpack.c.b16 %v568, %v565
        %v581 = vpack.c.b16 %v569, %v566
        %v582 = vpack.c.b16 %v573, %v570
        %v583 = vpack.c.b16 %v574, %v571
        %v584 = vpack.c.b16 %v575, %v572
        %v585 = vpack.c.b16 %v576, %v576
        %v586 = vpack.c.b16 %v577, %v577
        %v587 = vpack.c.b16 %v578, %v578
        %vm594 = vcmask 293888
        %v596 = vsel %vm594, %v543, 0
        %vm598 = vcmask 1041408
        %v600 = vsel %vm598, %v585, 0
        %v603 = vsel %vm598, %v586, 0
        %v606 = vsel %vm598, %v587, 0
        %608 = vmatprep.subr.bf16.mxu0 %v580
        %609 = vmatpush1.bf16.msra.mxu0 %v579
        %610 = vmatprep.subr.bf16.mxu0 %v583
        %611 = vmatpush1.bf16.msra.mxu0 %v582
        %612 = vmatprep.subr.bf16.mxu0 %v603
        %613 = vmatpush1.bf16.msra.mxu0 %v600
        %614 = vmatprep.subr.bf16.mxu0 0
        %615 = vmatpush1.bf16.msra.mxu0 0
        %616 = vmatprep.subr.bf16.mxu0 0
        %617 = vmatpush1.bf16.msra.mxu0 0
        %618 = vmatprep.subr.bf16.mxu0 0
        %619 = vmatpush1.bf16.msra.mxu0 0
        %620 = vmatprep.subr.bf16.mxu0 0
        %621 = vmatpush1.bf16.msra.mxu0 0
        %622 = vmatprep.subr.bf16.mxu0 0
        %623 = vmatpush1.bf16.msra.mxu0 0
        %624 = vmatprep.subr.bf16.mxu0 0
        %625 = vmatpush1.bf16.msra.mxu0 0
        %626 = vmatprep.subr.bf16.mxu0 0
        %627 = vmatpush1.bf16.msra.mxu0 0
        %628 = vmatprep.subr.bf16.mxu0 0
        %629 = vmatpush1.bf16.msra.mxu0 0
        %630 = vmatprep.subr.bf16.mxu0 0
        %631 = vmatpush1.bf16.msra.mxu0 0
        %632 = vmatprep.subr.bf16.mxu0 0
        %633 = vmatpush1.bf16.msra.mxu0 0
        %634 = vmatprep.subr.bf16.mxu0 0
        %635 = vmatpush1.bf16.msra.mxu0 0
        %636 = vmatprep.subr.bf16.mxu0 0
        %637 = vmatpush1.bf16.msra.mxu0 0
        %638 = vmatprep.subr.bf16.mxu0 0
        %639 = vmatpush1.bf16.msra.mxu0 0
        %640 = vmatprep.mubr.bf16.mxu0 0
        %641 = vmatmul.mubr.bf16.gmra.mrb[0].mxu0 %v596
        %v642 = vpop.f32.mrb[0].mxu0
        %v643 = vadd.f32 0.0, %v642
        %v644 = vpop.f32.mrb[0].mxu0
        %v645 = vadd.f32 0.0, %v644
        %v646 = vpop.f32.mrb[0].mxu0
        %v647 = vpop.f32.mrb[0].mxu0
        %648 = vdwg.mxu0
        %649 = vmatprep.subr.bf16.mxu0 0
        %650 = vmatpush1.bf16.msra.mxu0 %v581
        %651 = vmatprep.subr.bf16.mxu0 0
        %652 = vmatpush1.bf16.msra.mxu0 %v584
        %653 = vmatprep.subr.bf16.mxu0 0
        %654 = vmatpush1.bf16.msra.mxu0 %v606
        %655 = vmatprep.subr.bf16.mxu0 0
        %656 = vmatpush1.bf16.msra.mxu0 0
        %657 = vmatprep.subr.bf16.mxu0 0
        %658 = vmatpush1.bf16.msra.mxu0 0
        %659 = vmatprep.subr.bf16.mxu0 0
        %660 = vmatpush1.bf16.msra.mxu0 0
        %661 = vmatprep.subr.bf16.mxu0 0
        %662 = vmatpush1.bf16.msra.mxu0 0
        %663 = vmatprep.subr.bf16.mxu0 0
        %664 = vmatpush1.bf16.msra.mxu0 0
        %665 = vmatprep.subr.bf16.mxu0 0
        %666 = vmatpush1.bf16.msra.mxu0 0
        %667 = vmatprep.subr.bf16.mxu0 0
        %668 = vmatpush1.bf16.msra.mxu0 0
        %669 = vmatprep.subr.bf16.mxu0 0
        %670 = vmatpush1.bf16.msra.mxu0 0
        %671 = vmatprep.subr.bf16.mxu0 0
        %672 = vmatpush1.bf16.msra.mxu0 0
        %673 = vmatprep.subr.bf16.mxu0 0
        %674 = vmatpush1.bf16.msra.mxu0 0
        %675 = vmatprep.subr.bf16.mxu0 0
        %676 = vmatpush1.bf16.msra.mxu0 0
        %677 = vmatprep.subr.bf16.mxu0 0
        %678 = vmatpush1.bf16.msra.mxu0 0
        %679 = vmatprep.subr.bf16.mxu0 0
        %680 = vmatpush1.bf16.msra.mxu0 0
        %681 = vmatprep.mubr.bf16.mxu0 0
        %682 = vmatmul.mubr.bf16.gmra.mrb[0].mxu0 %v596
        %v683 = vpop.f32.mrb[0].mxu0
        %v684 = vadd.f32 0.0, %v683
        %v685 = vpop.f32.mrb[0].mxu0
        %v686 = vpop.f32.mrb[0].mxu0
        %v687 = vpop.f32.mrb[0].mxu0
        %688 = vdwg.mxu0
        %689 = vst [vmem:[%s295] sm:$0xff] %v643
        %690 = vst [vmem:[%s295 + $0x8] sm:$0xff] %v645
        %691 = vst [vmem:[%s295 + $0x10] sm:$0xff] %v684
        %v692 = vld [vmem:[%s3] sm:$0x7]
        %v694 = vlaneseq
        %v695 = vshrl.u32 %v694, 7
        %v696 = vsub.s32 0, %v695
        %v697 = vrot.slane %v692, %v696
        %v698 = vlaneseq
        %v699 = vshrl.u32 %v698, 7
        %v700 = vsub.s32 1, %v699
        %v701 = vrot.slane %v692, %v700
        %v702 = vlaneseq
        %v703 = vshrl.u32 %v702, 7
        %v704 = vsub.s32 2, %v703
        %v705 = vrot.slane %v692, %v704
        %v709 = vmul.f32 %v643, %v697
        %v710 = vmul.f32 %v645, %v701
        %v711 = vmul.f32 %v684, %v705
        %v712 = vadd.f32 %v709, %v710
        %v713 = vadd.f32 %v712, %v711
        %714 = vadd.xlane.f32.xlu0 %v713
        %v715 = vpop.xlane.xlu0 %714
        %vm716 = vcmask 7168
        %717 = vst.msk [vmem:[%s311] sm:$0xff] %vm716, %v715
        %v718 = vmul.f32 %v709, %v643
        %v719 = vmul.f32 %v710, %v645
        %v720 = vmul.f32 %v711, %v684
        %v721 = vadd.f32 %v718, %v719
        %v722 = vadd.f32 %v721, %v720
        %723 = vadd.xlane.f32.xlu0 %v722
        %v724 = vpop.xlane.xlu0 %723
        %725 = vst.msk [vmem:[%s315] sm:$0xff] %vm716, %v724
        %s726 = sand.u32 %s143, 1
        %s727 = scalar_lea.sflag [#allocation5], %s726
        %s728 = sand.u32 %s143, 1
        %s729 = smul.addr %s728, 24
        %s730 = scalar_lea.vmem [#allocation6], %s729
        %p731 = scmp.lt.s32.totalorder %s25, 1
        %s732 = scalar_select %p731, %s25, 1
        %s733 = smul.addr %s732, 8
        %s734 = scalar_lea.vmem %s6, %s733
        %p735 = scmp.lt.s32.totalorder %s25, 1
        %s736 = scalar_select %p735, %s25, 1
        %s737 = smul.addr %s736, 8
        %s738 = scalar_lea.vmem %s7, %s737
        // Predicated region
        $region45: #{tpu_custom_call.1} parent=39 // pred_check
          %p739 = pneg %p153
        $region46: #{tpu_custom_call.1} parent=39 // pred_check_branch
          %741 = sbr.rel (%p739) target = $region48
        $region47: #{tpu_custom_call.1} parent=39 // pred_region
          %s743 = ssub.s32 384, 384
          %744 = vsyncadd %s727, %s743
          %s745 = smul.addr %s25, 3
          %s746 = smul.addr %s745, 128
          %s747 = scalar_lea.hbm %s5, %s746
          %s749 = sshll.u32 %s730, 4
          %s750 = int_to_ptr.vmem [resolvable:$true] %s749
          %752 = dma.vmem_to_hbm [thread:$0]  %s750, 384, %s747, %s727
        $region48: #{tpu_custom_call.1} parent=39 // pred_fallthru
          _
        // Predicated region
        $region49: #{tpu_custom_call.1} parent=39 // pred_check
          %p753 = pneg %p179
        $region50: #{tpu_custom_call.1} parent=39 // pred_check_branch
          %755 = sbr.rel (%p753) target = $region52
        $region51: #{tpu_custom_call.1} parent=39 // pred_region
          _
        $region52: #{tpu_custom_call.1} parent=39 // pred_fallthru
          _
        // Predicated region
        $region53: #{tpu_custom_call.1} parent=39 // pred_check
          %p756 = pneg %p205
        $region54: #{tpu_custom_call.1} parent=39 // pred_check_branch
          %758 = sbr.rel (%p756) target = $region56
        $region55: #{tpu_custom_call.1} parent=39 // pred_region
          _
        $region56: #{tpu_custom_call.1} parent=39 // pred_fallthru
          _
      $region40: #{tpu_custom_call.1} parent=5 // pred_fallthru
        _
      %p759 = scmp.le.s32.totalorder 2, %s20
      // Predicated region
      $region57: #{tpu_custom_call.1} parent=5 // pred_check
        %p760 = pneg %p759
      $region58: #{tpu_custom_call.1} parent=5 // pred_check_branch
        %762 = sbr.rel (%p760) target = $region60
      $region59: #{tpu_custom_call.1} parent=5 // pred_region
        %s763 = ssub.s32 %s20, 2
        // Predicated region
        $region61: #{tpu_custom_call.1} parent=59 // pred_check
          %p764 = pneg %p159
        $region62: #{tpu_custom_call.1} parent=59 // pred_check_branch
          %766 = sbr.rel (%p764) target = $region64
        $region63: #{tpu_custom_call.1} parent=59 // pred_region
          %s767 = sand.u32 %s144, 1
          %s768 = scalar_lea.sflag [#allocation5], %s767
          %s769 = sand.u32 %s144, 1
          %s770 = smul.addr %s769, 24
          %s771 = scalar_lea.vmem [#allocation6], %s770
          %772 = dma.done %s768, 384
        $region64: #{tpu_custom_call.1} parent=59 // pred_fallthru
          _
        // Predicated region
        $region65: #{tpu_custom_call.1} parent=59 // pred_check
          %p773 = pneg %p185
        $region66: #{tpu_custom_call.1} parent=59 // pred_check_branch
          %775 = sbr.rel (%p773) target = $region68
        $region67: #{tpu_custom_call.1} parent=59 // pred_region
          %p776 = scmp.lt.s32.totalorder %s26, 1
          %s777 = scalar_select %p776, %s26, 1
          %s778 = smul.addr %s777, 8
          %s779 = scalar_lea.vmem %s6, %s778
        $region68: #{tpu_custom_call.1} parent=59 // pred_fallthru
          _
        // Predicated region
        $region69: #{tpu_custom_call.1} parent=59 // pred_check
          %p780 = pneg %p211
        $region70: #{tpu_custom_call.1} parent=59 // pred_check_branch
          %782 = sbr.rel (%p780) target = $region72
        $region71: #{tpu_custom_call.1} parent=59 // pred_region
          %p783 = scmp.lt.s32.totalorder %s26, 1
          %s784 = scalar_select %p783, %s26, 1
          %s785 = smul.addr %s784, 8
          %s786 = scalar_lea.vmem %s7, %s785
        $region72: #{tpu_custom_call.1} parent=59 // pred_fallthru
          _
      $region60: #{tpu_custom_call.1} parent=5 // pred_fallthru
        _
    $region6: #{tpu_custom_call.1} parent=1 // loop_footer
      %s24 = sadd.s32 1, %s20
    $region7: #{tpu_custom_call.1} parent=1 // loop_footer_branch
      %19 = sbr.rel target = $region3
    $region8: #{tpu_custom_call.1} parent=1 // loop_exit
      _
    %787 = vsyncpa [#allocation4], 1
    %s788 = scalar_lea.sflag [#allocation4], 1
    %789 = vsyncpa %s788, 1
    %790 = vsyncpa [#allocation5], 1
    %s791 = scalar_lea.sflag [#allocation5], 1
    %792 = vsyncpa %s791, 1

// kernel: tpu_custom_call.1
$region0: #{tpu_custom_call.1}
  #allocation0 [shape = 'u32[]', space=smem, size = 0x4, offset = 0x4, fixed_abs, tag = 'smem constant byte address 0x4 - core index']
  #allocation1 [shape = 'u32[144,128]{1,0:T(1,128)}', space=vmem, size = 0x12000, scoped, tag = 'internal scratch']
  #allocation2 [shape = 'bf16[36,384]{1,0:T(8,128)(2,1)}', space=vmem, size = 0x7800, scoped, tag = 'scratch operand']
  %s0 = inlined_call_operand.hbm [shape: f32[2,4,384], index: 0, kind: input, shape index: {}]
  %s1 = inlined_call_operand.vmem [shape: f32[4,1], index: 1, kind: input, shape index: {}]
  %s2 = inlined_call_operand.vmem [shape: f32[4,1], index: 2, kind: input, shape index: {}]
  %s3 = inlined_call_operand.vmem [shape: f32[1,384], index: 3, kind: input, shape index: {}]
  %s4 = inlined_call_operand.vmem [shape: bf16[8,36], index: 4, kind: input, shape index: {}]
  %s5 = inlined_call_operand.hbm [shape: f32[2,8,384], index: 5, kind: output, shape index: {0}]
  %s6 = inlined_call_operand.vmem [shape: f32[2,8,1], index: 6, kind: output, shape index: {1}]
  %s7 = inlined_call_operand.vmem [shape: f32[2,8,1], index: 7, kind: output, shape index: {2}]
  %8 = xla_tuple %s5, %s6, %s7
  %s9 = sld [smem:[#allocation0]]
  $region73: #{tpu_custom_call.1} parent=0
    _
  %s11 = ssub.s32 1, %s9
  %s12 = scalar_select 0, %s11, %s9
  $region1: #{tpu_custom_call.1} parent=0
    #allocation3 [shape = 'u8[12288]{0}', space=vmem, size = 0x3000, scoped, tag = 'input window, operand 0']
    #allocation4 [shape = 's32[2]{0}', space=sflag, size = 0x8, scoped, tag = 'scoped memory for tpu_custom_call.1']
    #allocation5 [shape = 's32[2]{0}', space=sflag, size = 0x8, scoped, tag = 'scoped memory for tpu_custom_call.1']
    #allocation6 [shape = 'u8[24576]{0}', space=vmem, size = 0x6000, scoped, tag = 'output window, operand 0']
    %13 = vsyncpa [#allocation4], 0
    %s14 = scalar_lea.sflag [#allocation4], 1
    %15 = vsyncpa %s14, 0
    %16 = vsyncpa [#allocation5], 0
    %s17 = scalar_lea.sflag [#allocation5], 1
    %18 = vsyncpa %s17, 0
    loop: start=0, step=1, limit=4
    $region2: #{tpu_custom_call.1} parent=1 // loop_pre_header
      _
    $region3: #{tpu_custom_call.1} parent=1 // loop_header
      %s20 = sphi 0, %s24
      %p21 = scmp.ge.s32.totalorder %s20, 4
      %s30 = sphi 0, %s32
      %s33 = sphi 0, %s30
      %s34 = sphi 0, %s33
      %s50 = sphi 0, %s34
      %s54 = sphi 0, %s54
      %s56 = sphi 0, %s54
      %s57 = sphi 0, %s56
      %s71 = sphi 0, %s57
      %s75 = sphi 0, %s75
      %s77 = sphi 0, %s75
      %s78 = sphi 0, %s77
      %s92 = sphi 0, %s78
      %s96 = sphi 0, %s96
      %s98 = sphi 0, %s96
      %s99 = sphi 0, %s98
      %s113 = sphi 0, %s99
      %s117 = sphi 0, %s117
      %s119 = sphi 0, %s117
      %s120 = sphi 0, %s119
      %s134 = sphi 0, %s120
      %s140 = sphi 0, %s142
      %s143 = sphi 0, %s140
      %s144 = sphi 0, %s143
      %s160 = sphi 0, %s144
      %s166 = sphi 0, %s168
      %s169 = sphi 0, %s166
      %s170 = sphi 0, %s169
      %s186 = sphi 0, %s170
      %s192 = sphi 0, %s194
      %s195 = sphi 0, %s192
      %s196 = sphi 0, %s195
      %s212 = sphi 0, %s196
    $region4: #{tpu_custom_call.1} parent=1 // loop_header_branch
      %23 = sbr.rel (%p21) target = $region8
    $region5: #{tpu_custom_call.1} parent=1 // loop_body
      %s25 = ssub.s32 %s20, 1
      %s26 = ssub.s32 %s20, 2
      %s27 = sadd.s32 %s20, 1
      %s28 = ssub.s32 %s20, %s27
      %p29 = scmp.eq.s32.totalorder %s28, 0
      %s31 = sadd.s32 %s30, 1
      %s32 = scalar_select %p29, %s30, %s31
      %p35 = pneg %p29
      %p36 = scmp.eq.s32.totalorder %s20, 1
      %p37 = por %p35, %p36
      %p38 = scmp.ne.s32.totalorder %s30, %s33
      %p39 = scmp.eq.s32.totalorder %s20, 0
      %p40 = por %p38, %p39
      %p41 = scmp.ne.s32.totalorder %s30, %s33
      %p42 = scmp.eq.s32.totalorder %s25, 1
      %p43 = por %p41, %p42
      %p44 = scmp.ne.s32.totalorder %s33, %s34
      %p45 = scmp.eq.s32.totalorder %s25, 0
      %p46 = por %p44, %p45
      %p47 = scmp.ne.s32.totalorder %s33, %s34
      %p48 = scmp.eq.s32.totalorder %s26, 1
      %p49 = por %p47, %p48
      %p51 = scmp.ne.s32.totalorder %s34, %s50
      %p52 = scmp.eq.s32.totalorder %s26, 0
      %p53 = por %p51, %p52
      %s55 = sadd.s32 %s54, 1
      %p58 = scmp.eq.s32.totalorder %s20, 1
      %p59 = scmp.ne.s32.totalorder %s54, %s56
      %p60 = scmp.eq.s32.totalorder %s20, 0
      %p61 = por %p59, %p60
      %p62 = scmp.ne.s32.totalorder %s54, %s56
      %p63 = scmp.eq.s32.totalorder %s25, 1
      %p64 = por %p62, %p63
      %p65 = scmp.ne.s32.totalorder %s56, %s57
      %p66 = scmp.eq.s32.totalorder %s25, 0
      %p67 = por %p65, %p66
      %p68 = scmp.ne.s32.totalorder %s56, %s57
      %p69 = scmp.eq.s32.totalorder %s26, 1
      %p70 = por %p68, %p69
      %p72 = scmp.ne.s32.totalorder %s57, %s71
      %p73 = scmp.eq.s32.totalorder %s26, 0
      %p74 = por %p72, %p73
      %s76 = sadd.s32 %s75, 1
      %p79 = scmp.eq.s32.totalorder %s20, 1
      %p80 = scmp.ne.s32.totalorder %s75, %s77
      %p81 = scmp.eq.s32.totalorder %s20, 0
      %p82 = por %p80, %p81
      %p83 = scmp.ne.s32.totalorder %s75, %s77
      %p84 = scmp.eq.s32.totalorder %s25, 1
      %p85 = por %p83, %p84
      %p86 = scmp.ne.s32.totalorder %s77, %s78
      %p87 = scmp.eq.s32.totalorder %s25, 0
      %p88 = por %p86, %p87
      %p89 = scmp.ne.s32.totalorder %s77, %s78
      %p90 = scmp.eq.s32.totalorder %s26, 1
      %p91 = por %p89, %p90
      %p93 = scmp.ne.s32.totalorder %s78, %s92
      %p94 = scmp.eq.s32.totalorder %s26, 0
      %p95 = por %p93, %p94
      %s97 = sadd.s32 %s96, 1
      %p100 = scmp.eq.s32.totalorder %s20, 1
      %p101 = scmp.ne.s32.totalorder %s96, %s98
      %p102 = scmp.eq.s32.totalorder %s20, 0
      %p103 = por %p101, %p102
      %p104 = scmp.ne.s32.totalorder %s96, %s98
      %p105 = scmp.eq.s32.totalorder %s25, 1
      %p106 = por %p104, %p105
      %p107 = scmp.ne.s32.totalorder %s98, %s99
      %p108 = scmp.eq.s32.totalorder %s25, 0
      %p109 = por %p107, %p108
      %p110 = scmp.ne.s32.totalorder %s98, %s99
      %p111 = scmp.eq.s32.totalorder %s26, 1
      %p112 = por %p110, %p111
      %p114 = scmp.ne.s32.totalorder %s99, %s113
      %p115 = scmp.eq.s32.totalorder %s26, 0
      %p116 = por %p114, %p115
      %s118 = sadd.s32 %s117, 1
      %p121 = scmp.eq.s32.totalorder %s20, 1
      %p122 = scmp.ne.s32.totalorder %s117, %s119
      %p123 = scmp.eq.s32.totalorder %s20, 0
      %p124 = por %p122, %p123
      %p125 = scmp.ne.s32.totalorder %s117, %s119
      %p126 = scmp.eq.s32.totalorder %s25, 1
      %p127 = por %p125, %p126
      %p128 = scmp.ne.s32.totalorder %s119, %s120
      %p129 = scmp.eq.s32.totalorder %s25, 0
      %p130 = por %p128, %p129
      %p131 = scmp.ne.s32.totalorder %s119, %s120
      %p132 = scmp.eq.s32.totalorder %s26, 1
      %p133 = por %p131, %p132
      %p135 = scmp.ne.s32.totalorder %s120, %s134
      %p136 = scmp.eq.s32.totalorder %s26, 0
      %p137 = por %p135, %p136
      %s138 = ssub.s32 %s20, %s27
      %p139 = scmp.eq.s32.totalorder %s138, 0
      %s141 = sadd.s32 %s140, 1
      %s142 = scalar_select %p139, %s140, %s141
      %p145 = pneg %p139
      %p146 = scmp.eq.s32.totalorder %s20, 1
      %p147 = por %p145, %p146
      %p148 = scmp.ne.s32.totalorder %s140, %s143
      %p149 = scmp.eq.s32.totalorder %s20, 0
      %p150 = por %p148, %p149
      %p151 = scmp.ne.s32.totalorder %s140, %s143
      %p152 = scmp.eq.s32.totalorder %s25, 1
      %p153 = por %p151, %p152
      %p154 = scmp.ne.s32.totalorder %s143, %s144
      %p155 = scmp.eq.s32.totalorder %s25, 0
      %p156 = por %p154, %p155
      %p157 = scmp.ne.s32.totalorder %s143, %s144
      %p158 = scmp.eq.s32.totalorder %s26, 1
      %p159 = por %p157, %p158
      %p161 = scmp.ne.s32.totalorder %s144, %s160
      %p162 = scmp.eq.s32.totalorder %s26, 0
      %p163 = por %p161, %p162
      %s164 = ssub.s32 %s20, %s27
      %p165 = scmp.eq.s32.totalorder %s164, 0
      %s167 = sadd.s32 %s166, 1
      %s168 = scalar_select %p165, %s166, %s167
      %p171 = pneg %p165
      %p172 = scmp.eq.s32.totalorder %s20, 1
      %p173 = por %p171, %p172
      %p174 = scmp.ne.s32.totalorder %s166, %s169
      %p175 = scmp.eq.s32.totalorder %s20, 0
      %p176 = por %p174, %p175
      %p177 = scmp.ne.s32.totalorder %s166, %s169
      %p178 = scmp.eq.s32.totalorder %s25, 1
      %p179 = por %p177, %p178
      %p180 = scmp.ne.s32.totalorder %s169, %s170
      %p181 = scmp.eq.s32.totalorder %s25, 0
      %p182 = por %p180, %p181
      %p183 = scmp.ne.s32.totalorder %s169, %s170
      %p184 = scmp.eq.s32.totalorder %s26, 1
      %p185 = por %p183, %p184
      %p187 = scmp.ne.s32.totalorder %s170, %s186
      %p188 = scmp.eq.s32.totalorder %s26, 0
      %p189 = por %p187, %p188
      %s190 = ssub.s32 %s20, %s27
      %p191 = scmp.eq.s32.totalorder %s190, 0
      %s193 = sadd.s32 %s192, 1
      %s194 = scalar_select %p191, %s192, %s193
      %p197 = pneg %p191
      %p198 = scmp.eq.s32.totalorder %s20, 1
      %p199 = por %p197, %p198
      %p200 = scmp.ne.s32.totalorder %s192, %s195
      %p201 = scmp.eq.s32.totalorder %s20, 0
      %p202 = por %p200, %p201
      %p203 = scmp.ne.s32.totalorder %s192, %s195
      %p204 = scmp.eq.s32.totalorder %s25, 1
      %p205 = por %p203, %p204
      %p206 = scmp.ne.s32.totalorder %s195, %s196
      %p207 = scmp.eq.s32.totalorder %s25, 0
      %p208 = por %p206, %p207
      %p209 = scmp.ne.s32.totalorder %s195, %s196
      %p210 = scmp.eq.s32.totalorder %s26, 1
      %p211 = por %p209, %p210
      %p213 = scmp.ne.s32.totalorder %s196, %s212
      %p214 = scmp.eq.s32.totalorder %s26, 0
      %p215 = por %p213, %p214
      %p216 = scmp.le.s32.totalorder 1, %s20
      %p217 = scmp.lt.s32.totalorder %s20, 3
      %p218 = pnand %p216, %p217
      %p219 = pneg %p218
      // Predicated region
      $region9: #{tpu_custom_call.1} parent=5 // pred_check
        _
      $region10: #{tpu_custom_call.1} parent=5 // pred_check_branch
        %221 = sbr.rel (%p218) target = $region12
      $region11: #{tpu_custom_call.1} parent=5 // pred_region
        %s222 = ssub.s32 %s20, 1
        // Predicated region
        $region13: #{tpu_custom_call.1} parent=11 // pred_check
          %p223 = pneg %p67
        $region14: #{tpu_custom_call.1} parent=11 // pred_check_branch
          %225 = sbr.rel (%p223) target = $region16
        $region15: #{tpu_custom_call.1} parent=11 // pred_region
          _
        $region16: #{tpu_custom_call.1} parent=11 // pred_fallthru
          _
        // Predicated region
        $region17: #{tpu_custom_call.1} parent=11 // pred_check
          %p226 = pneg %p88
        $region18: #{tpu_custom_call.1} parent=11 // pred_check_branch
          %228 = sbr.rel (%p226) target = $region20
        $region19: #{tpu_custom_call.1} parent=11 // pred_region
          _
        $region20: #{tpu_custom_call.1} parent=11 // pred_fallthru
          _
        // Predicated region
        $region21: #{tpu_custom_call.1} parent=11 // pred_check
          %p229 = pneg %p109
        $region22: #{tpu_custom_call.1} parent=11 // pred_check_branch
          %231 = sbr.rel (%p229) target = $region24
        $region23: #{tpu_custom_call.1} parent=11 // pred_region
          _
        $region24: #{tpu_custom_call.1} parent=11 // pred_fallthru
          _
        // Predicated region
        $region25: #{tpu_custom_call.1} parent=11 // pred_check
          %p232 = pneg %p130
        $region26: #{tpu_custom_call.1} parent=11 // pred_check_branch
          %234 = sbr.rel (%p232) target = $region28
        $region27: #{tpu_custom_call.1} parent=11 // pred_region
          _
        $region28: #{tpu_custom_call.1} parent=11 // pred_fallthru
          _
      $region12: #{tpu_custom_call.1} parent=5 // pred_fallthru
        _
      %p235 = scmp.lt.s32.totalorder %s20, 2
      // Predicated region
      $region29: #{tpu_custom_call.1} parent=5 // pred_check
        %p236 = pneg %p235
      $region30: #{tpu_custom_call.1} parent=5 // pred_check_branch
        %238 = sbr.rel (%p236) target = $region32
      $region31: #{tpu_custom_call.1} parent=5 // pred_region
        // Predicated region
        $region33: #{tpu_custom_call.1} parent=31 // pred_check
          %p239 = pneg %p40
        $region34: #{tpu_custom_call.1} parent=31 // pred_check_branch
          %241 = sbr.rel (%p239) target = $region36
        $region35: #{tpu_custom_call.1} parent=31 // pred_region
          %s242 = sand.u32 %s30, 1
          %s243 = scalar_lea.sflag [#allocation4], %s242
          %s244 = sand.u32 %s30, 1
          %s245 = smul.addr %s244, 12
          %s246 = scalar_lea.vmem [#allocation3], %s245
          %s248 = ssub.s32 192, 192
          %249 = vsyncadd %s243, %s248
          %s250 = smul.addr %s20, 3
          %s251 = smul.addr %s250, 64
          %s252 = scalar_lea.hbm %s0, %s251
          %s254 = sshll.u32 %s246, 4
          %s255 = int_to_ptr.vmem [resolvable:$true] %s254
          %257 = dma.hbm_to_vmem [thread:$0]  %s252, 192, %s255, %s243
        $region36: #{tpu_custom_call.1} parent=31 // pred_fallthru
          _
      $region32: #{tpu_custom_call.1} parent=5 // pred_fallthru
        _
      %p258 = scmp.le.s32.totalorder 1, %s20
      %p259 = scmp.lt.s32.totalorder %s20, 3
      %p260 = pnand %p258, %p259
      %p261 = pneg %p260
      // Predicated region
      $region37: #{tpu_custom_call.1} parent=5 // pred_check
        _
      $region38: #{tpu_custom_call.1} parent=5 // pred_check_branch
        %263 = sbr.rel (%p260) target = $region40
      $region39: #{tpu_custom_call.1} parent=5 // pred_region
        %s264 = ssub.s32 %s20, 1
        %s265 = sand.u32 %s33, 1
        %s266 = scalar_lea.sflag [#allocation4], %s265
        %s267 = sand.u32 %s33, 1
        %s268 = smul.addr %s267, 12
        %s269 = scalar_lea.vmem [#allocation3], %s268
        // Predicated region
        $region41: #{tpu_custom_call.1} parent=39 // pred_check
          %p270 = pneg %p46
        $region42: #{tpu_custom_call.1} parent=39 // pred_check_branch
          %272 = sbr.rel (%p270) target = $region44
        $region43: #{tpu_custom_call.1} parent=39 // pred_region
          %273 = dma.done %s266, 192
        $region44: #{tpu_custom_call.1} parent=39 // pred_fallthru
          _
        %s274 = sand.u32 %s33, 1
        %s275 = scalar_lea.sflag [#allocation4], %s274
        %s276 = sand.u32 %s33, 1
        %s277 = smul.addr %s276, 12
        %s278 = scalar_lea.vmem [#allocation3], %s277
        %p279 = pneg %p46
        %p280 = pneg %p43
        %p281 = pneg %p67
        %p282 = pneg %p64
        %p283 = pneg %p88
        %p284 = pneg %p85
        %p285 = pneg %p109
        %p286 = pneg %p106
        %p287 = pneg %p130
        %p288 = pneg %p127
        %p289 = pneg %p156
        %p290 = pneg %p153
        %s291 = sand.u32 %s143, 1
        %s292 = scalar_lea.sflag [#allocation5], %s291
        %s293 = sand.u32 %s143, 1
        %s294 = smul.addr %s293, 24
        %s295 = scalar_lea.vmem [#allocation6], %s294
        %p296 = pneg %p182
        %p297 = pneg %p179
        %p298 = scmp.lt.s32.totalorder %s25, 1
        %s299 = scalar_select %p298, %s25, 1
        %s300 = smul.addr %s299, 8
        %s301 = scalar_lea.vmem %s6, %s300
        %p302 = pneg %p208
        %p303 = pneg %p205
        %p304 = scmp.lt.s32.totalorder %s25, 1
        %s305 = scalar_select %p304, %s25, 1
        %s306 = smul.addr %s305, 8
        %s307 = scalar_lea.vmem %s7, %s306
        %p308 = scmp.lt.s32.totalorder %s25, 1
        %s309 = scalar_select %p308, %s25, 1
        %s310 = smul.addr %s309, 8
        %s311 = scalar_lea.vmem %s6, %s310
        %p312 = scmp.lt.s32.totalorder %s25, 1
        %s313 = scalar_select %p312, %s25, 1
        %s314 = smul.addr %s313, 8
        %s315 = scalar_lea.vmem %s7, %s314
        %v317 = vld [vmem:[%s269] sm:$0xff]
        %v318 = vld [vmem:[%s269 + $0x8] sm:$0xf]
        %v319 = vld [vmem:[%s1] sm:$0xf]
        %321 = vset.pattern.permute.xlu0 0
        %322 = vperm.xlu0 %321, %v319
        %v323 = vpop.permute.xlu0 %322
        %v325 = vunpack.c.l.s4 839922192
        %v326 = vunpack.c.0.s8 %v325
        %v327 = vlaneseq
        %v328 = vshrl.u32 %v327, 7
        %v329 = vsub.s32 %v326, %v328
        %v330 = vrot.slane %v323, %v329
        %v332 = vmul.f32 %v317, %v330
        %v333 = vmul.f32 %v318, %v330
        %v334 = vld [vmem:[%s2] sm:$0xf]
        %336 = vset.pattern.permute.xlu0 0
        %337 = vperm.xlu0 %336, %v334
        %v338 = vpop.permute.xlu0 %337
        %v340 = vunpack.c.l.s4 839922192
        %v341 = vunpack.c.0.s8 %v340
        %v342 = vlaneseq
        %v343 = vshrl.u32 %v342, 7
        %v344 = vsub.s32 %v341, %v343
        %v345 = vrot.slane %v338, %v344
        %v347 = vadd.f32 %v332, %v345
        %v348 = vadd.f32 %v333, %v345
        %vm349 = vcmp.ge.f32.partialorder %v347, 0.0
        %vm350 = vcmp.ge.f32.partialorder %v348, 0.0
        %v351 = vmul.f32 %v347, 0.01
        %v352 = vmul.f32 %v348, 0.01
        %v353 = vsel %vm349, %v347, %v351
        %v354 = vsel %vm350, %v348, %v352
        %v355 = vld [vmem:[%s3] sm:$0x7]
        %v357 = vlaneseq
        %v358 = vshrl.u32 %v357, 7
        %v359 = vsub.s32 0, %v358
        %v360 = vrot.slane %v355, %v359
        %v361 = vlaneseq
        %v362 = vshrl.u32 %v361, 7
        %v363 = vsub.s32 1, %v362
        %v364 = vrot.slane %v355, %v363
        %v365 = vlaneseq
        %v366 = vshrl.u32 %v365, 7
        %v367 = vsub.s32 2, %v366
        %v368 = vrot.slane %v355, %v367
        %v370 = vcombine.low %v360, %v364
        %v372 = vmul.f32 %v353, %v370
        %v373 = vmul.f32 %v354, %v368
        %v375 = vcombine.high %v372, %v372
        %v377 = vpack.c.bf16 %v372, %v372
        %v378 = vpack.c.bf16 %v375, %v375
        %v379 = vpack.c.bf16 %v373, %v373
        %v383 = vunpack.c.l.b16 %v377
        %v384 = vunpack.c.l.b16 %v378
        %v385 = vunpack.c.l.b16 %v379
        %v386 = vpack.c.b16 %v384, %v383
        %v387 = vpack.c.b16 %v385, %v385
        %388 = vrot.lane.b32.xlu0 %v386, 19
        %v389 = vpop.permute.xlu0 %388
        %390 = vrot.lane.b32.xlu0 %v387, 19
        %v391 = vpop.permute.xlu0 %390
        %v392 = vrot.slane %v389, 4
        %vm393 = vcmask 154624
        %v394 = vsel %vm393, %v392, %v389
        %v395 = vsel %vm393, %v392, %v391
        %vm398 = vcmask 1041560
        %vm399 = vcmask 1045508
        %vm400 = vmor %vm399, %vm398
        %401 = vst.msk [vmem:[#allocation2] sm:$0x33] %vm400, %v394
        %402 = vst [vmem:[#allocation2 + $0x8] sm:$0x3] %v395
        %vm404 = vcmask 148480
        %405 = vst.msk [vmem:[#allocation2] sm:$0x3] %vm404, %v391
        %v406 = vrot.slane %v386, 6
        %v407 = vrot.slane %v387, 6
        %408 = vrot.lane.b32.xlu0 %v406, 18
        %v409 = vpop.permute.xlu0 %408
        %410 = vrot.lane.b32.xlu0 %v407, 18
        %v411 = vpop.permute.xlu0 %410
        %v412 = vrot.slane %v409, 4
        %vm413 = vcmask 146432
        %v414 = vsel %vm413, %v412, %v409
        %v415 = vsel %vm413, %v412, %v411
        %vm418 = vcmask 1043602
        %vm419 = vcmask 1047558
        %vm420 = vmor %vm419, %vm418
        %421 = vst.msk [vmem:[#allocation2] sm:$0xcc] %vm420, %v414
        %422 = vst [vmem:[#allocation2 + $0x8] sm:$0xc] %v415
        %vm424 = vcmask 142338
        %425 = vst.msk [vmem:[#allocation2] sm:$0xc] %vm424, %v411
        %426 = vrot.lane.b32.xlu0 %v386, 17
        %v427 = vpop.permute.xlu0 %426
        %428 = vrot.lane.b32.xlu0 %v387, 17
        %v429 = vpop.permute.xlu0 %428
        %v430 = vrot.slane %v427, 4
        %vm431 = vcmask 138240
        %v432 = vsel %vm431, %v430, %v427
        %v433 = vsel %vm431, %v430, %v429
        %vm436 = vcmask 1041544
        %vm437 = vmor %vm399, %vm436
        %438 = vst.msk [vmem:[#allocation2 + $0xc] sm:$0x33] %vm437, %v432
        %439 = vst [vmem:[#allocation2 + $0x14] sm:$0x3] %v433
        %vm441 = vcmask 132096
        %442 = vst.msk [vmem:[#allocation2 + $0xc] sm:$0x3] %vm441, %v429
        %443 = vrot.lane.b32.xlu0 %v406, 1
        %v444 = vpop.permute.xlu0 %443
        %445 = vrot.lane.b32.xlu0 %v407, 1
        %v446 = vpop.permute.xlu0 %445
        %v447 = vrot.slane %v444, 4
        %vm448 = vcmask 7168
        %v449 = vsel %vm448, %v447, %v444
        %v450 = vsel %vm448, %v447, %v446
        %vm453 = vcmask 1043466
        %vm454 = vmor %vm419, %vm453
        %455 = vst.msk [vmem:[#allocation2 + $0xc] sm:$0xcc] %vm454, %v449
        %456 = vst [vmem:[#allocation2 + $0x14] sm:$0xc] %v450
        %vm458 = vcmask 3074
        %459 = vst.msk [vmem:[#allocation2 + $0xc] sm:$0xc] %vm458, %v446
        %462 = vst [vmem:[#allocation2 + $0x18] sm:$0x33] %v386
        %463 = vst [vmem:[#allocation2 + $0x20] sm:$0x3] %v387
        %464 = vrot.lane.b32.xlu0 %v406, 127
        %v465 = vpop.permute.xlu0 %464
        %466 = vrot.lane.b32.xlu0 %v407, 127
        %v467 = vpop.permute.xlu0 %466
        %v468 = vrot.slane %v465, 4
        %v469 = vrot.slane %v467, 4
        %vm470 = vcmask 1043456
        %v471 = vsel %vm470, %v468, %v469
        %vm472 = vcmask 1039360
        %v473 = vsel %vm472, %v465, %v471
        %476 = vst [vmem:[#allocation2 + $0x18] sm:$0xcc] %v473
        %vm477 = vcmask 1035266
        %478 = vst.msk [vmem:[#allocation2 + $0x20] sm:$0xc] %vm477, %v467
        %v479 = vpack.c.b16 %v383, %v383
        %v480 = vrot.slane %v479, 6
        %481 = vrot.lane.b32.xlu0 %v480, 127
        %v482 = vpop.permute.xlu0 %481
        %vm484 = vcmask 1044474
        %485 = vst.msk [vmem:[#allocation2 + $0x20] sm:$0xc] %vm484, %v482
        %486 = vrot.lane.b32.xlu0 %v386, 111
        %v487 = vpop.permute.xlu0 %486
        %488 = vrot.lane.b32.xlu0 %v387, 111
        %v489 = vpop.permute.xlu0 %488
        %v490 = vrot.slane %v487, 4
        %v491 = vrot.slane %v489, 4
        %v492 = vsel %vm470, %v490, %v491
        %vm493 = vcmask 908288
        %v494 = vsel %vm493, %v487, %v492
        %497 = vst [vmem:[#allocation2 + $0x24] sm:$0x33] %v494
        %vm498 = vcmask 902144
        %499 = vst.msk [vmem:[#allocation2 + $0x2c] sm:$0x3] %vm498, %v489
        %500 = vrot.lane.b32.xlu0 %v479, 111
        %v501 = vpop.permute.xlu0 %500
        %vm503 = vcmask 1042296
        %504 = vst.msk [vmem:[#allocation2 + $0x2c] sm:$0x3] %vm503, %v501
        %505 = vrot.lane.b32.xlu0 %v406, 110
        %v506 = vpop.permute.xlu0 %505
        %507 = vrot.lane.b32.xlu0 %v407, 110
        %v508 = vpop.permute.xlu0 %507
        %v509 = vrot.slane %v506, 4
        %v510 = vrot.slane %v508, 4
        %v511 = vsel %vm470, %v509, %v510
        %vm512 = vcmask 900096
        %v513 = vsel %vm512, %v506, %v511
        %516 = vst [vmem:[#allocation2 + $0x24] sm:$0xcc] %v513
        %vm517 = vcmask 896002
        %518 = vst.msk [vmem:[#allocation2 + $0x2c] sm:$0xc] %vm517, %v508
        %519 = vrot.lane.b32.xlu0 %v480, 110
        %v520 = vpop.permute.xlu0 %519
        %vm522 = vcmask 1044338
        %523 = vst.msk [vmem:[#allocation2 + $0x2c] sm:$0xc] %vm522, %v520
        %524 = vrot.lane.b32.xlu0 %v386, 109
        %v525 = vpop.permute.xlu0 %524
        %526 = vrot.lane.b32.xlu0 %v387, 109
        %v527 = vpop.permute.xlu0 %526
        %v528 = vrot.slane %v525, 4
        %v529 = vrot.slane %v527, 4
        %v530 = vsel %vm470, %v528, %v529
        %vm531 = vcmask 891904
        %v532 = vsel %vm531, %v525, %v530
        %535 = vst [vmem:[#allocation2 + $0x30] sm:$0x33] %v532
        %vm536 = vcmask 885760
        %537 = vst.msk [vmem:[#allocation2 + $0x38] sm:$0x3] %vm536, %v527
        %538 = vrot.lane.b32.xlu0 %v479, 109
        %v539 = vpop.permute.xlu0 %538
        %vm541 = vcmask 1042280
        %542 = vst.msk [vmem:[#allocation2 + $0x38] sm:$0x3] %vm541, %v539
        %v543 = vld [vmem:[%s4] sm:$0xf]
        %v544 = vld [vmem:[#allocation2] sm:$0xff]
        %v545 = vld [vmem:[#allocation2 + $0x8] sm:$0xf]
        %v546 = vld [vmem:[#allocation2 + $0xc] sm:$0xff]
        %v547 = vld [vmem:[#allocation2 + $0x14] sm:$0xf]
        %v548 = vld [vmem:[#allocation2 + $0x18] sm:$0xff]
        %v549 = vld [vmem:[#allocation2 + $0x20] sm:$0xf]
        %v550 = vld [vmem:[#allocation2 + $0x24] sm:$0xff]
        %v551 = vld [vmem:[#allocation2 + $0x2c] sm:$0xf]
        %v552 = vld [vmem:[#allocation2 + $0x30] sm:$0x33]
        %v553 = vld [vmem:[#allocation2 + $0x38] sm:$0x3]
        %v564 = vunpack.c.l.b16 %v544
        %v565 = vunpack.c.h.b16 %v544
        %v566 = vunpack.c.l.b16 %v545
        %v567 = vunpack.c.l.b16 %v546
        %v568 = vunpack.c.h.b16 %v546
        %v569 = vunpack.c.l.b16 %v547
        %v570 = vunpack.c.l.b16 %v548
        %v571 = vunpack.c.h.b16 %v548
        %v572 = vunpack.c.l.b16 %v549
        %v573 = vunpack.c.l.b16 %v550
        %v574 = vunpack.c.h.b16 %v550
        %v575 = vunpack.c.l.b16 %v551
        %v576 = vunpack.c.l.b16 %v552
        %v577 = vunpack.c.h.b16 %v552
        %v578 = vunpack.c.l.b16 %v553
        %v579 = vpack.c.b16 %v567, %v564
        %v580 = vpack.c.b16 %v568, %v565
        %v581 = vpack.c.b16 %v569, %v566
        %v582 = vpack.c.b16 %v573, %v570
        %v583 = vpack.c.b16 %v574, %v571
        %v584 = vpack.c.b16 %v575, %v572
        %v585 = vpack.c.b16 %v576, %v576
        %v586 = vpack.c.b16 %v577, %v577
        %v587 = vpack.c.b16 %v578, %v578
        %vm594 = vcmask 293888
        %v596 = vsel %vm594, %v543, 0
        %vm598 = vcmask 1041408
        %v600 = vsel %vm598, %v585, 0
        %v603 = vsel %vm598, %v586, 0
        %v606 = vsel %vm598, %v587, 0
        %608 = vmatprep.subr.bf16.mxu0 %v580
        %609 = vmatpush1.bf16.msra.mxu0 %v579
        %610 = vmatprep.subr.bf16.mxu0 %v583
        %611 = vmatpush1.bf16.msra.mxu0 %v582
        %612 = vmatprep.subr.bf16.mxu0 %v603
        %613 = vmatpush1.bf16.msra.mxu0 %v600
        %614 = vmatprep.subr.bf16.mxu0 0
        %615 = vmatpush1.bf16.msra.mxu0 0
        %616 = vmatprep.subr.bf16.mxu0 0
        %617 = vmatpush1.bf16.msra.mxu0 0
        %618 = vmatprep.subr.bf16.mxu0 0
        %619 = vmatpush1.bf16.msra.mxu0 0
        %620 = vmatprep.subr.bf16.mxu0 0
        %621 = vmatpush1.bf16.msra.mxu0 0
        %622 = vmatprep.subr.bf16.mxu0 0
        %623 = vmatpush1.bf16.msra.mxu0 0
        %624 = vmatprep.subr.bf16.mxu0 0
        %625 = vmatpush1.bf16.msra.mxu0 0
        %626 = vmatprep.subr.bf16.mxu0 0
        %627 = vmatpush1.bf16.msra.mxu0 0
        %628 = vmatprep.subr.bf16.mxu0 0
        %629 = vmatpush1.bf16.msra.mxu0 0
        %630 = vmatprep.subr.bf16.mxu0 0
        %631 = vmatpush1.bf16.msra.mxu0 0
        %632 = vmatprep.subr.bf16.mxu0 0
        %633 = vmatpush1.bf16.msra.mxu0 0
        %634 = vmatprep.subr.bf16.mxu0 0
        %635 = vmatpush1.bf16.msra.mxu0 0
        %636 = vmatprep.subr.bf16.mxu0 0
        %637 = vmatpush1.bf16.msra.mxu0 0
        %638 = vmatprep.subr.bf16.mxu0 0
        %639 = vmatpush1.bf16.msra.mxu0 0
        %640 = vmatprep.mubr.bf16.mxu0 0
        %641 = vmatmul.mubr.bf16.gmra.mrb[0].mxu0 %v596
        %v642 = vpop.f32.mrb[0].mxu0
        %v643 = vadd.f32 0.0, %v642
        %v644 = vpop.f32.mrb[0].mxu0
        %v645 = vadd.f32 0.0, %v644
        %v646 = vpop.f32.mrb[0].mxu0
        %v647 = vpop.f32.mrb[0].mxu0
        %648 = vdwg.mxu0
        %649 = vmatprep.subr.bf16.mxu0 0
        %650 = vmatpush1.bf16.msra.mxu0 %v581
        %651 = vmatprep.subr.bf16.mxu0 0
        %652 = vmatpush1.bf16.msra.mxu0 %v584
        %653 = vmatprep.subr.bf16.mxu0 0
        %654 = vmatpush1.bf16.msra.mxu0 %v606
        %655 = vmatprep.subr.bf16.mxu0 0
        %656 = vmatpush1.bf16.msra.mxu0 0
        %657 = vmatprep.subr.bf16.mxu0 0
        %658 = vmatpush1.bf16.msra.mxu0 0
        %659 = vmatprep.subr.bf16.mxu0 0
        %660 = vmatpush1.bf16.msra.mxu0 0
        %661 = vmatprep.subr.bf16.mxu0 0
        %662 = vmatpush1.bf16.msra.mxu0 0
        %663 = vmatprep.subr.bf16.mxu0 0
        %664 = vmatpush1.bf16.msra.mxu0 0
        %665 = vmatprep.subr.bf16.mxu0 0
        %666 = vmatpush1.bf16.msra.mxu0 0
        %667 = vmatprep.subr.bf16.mxu0 0
        %668 = vmatpush1.bf16.msra.mxu0 0
        %669 = vmatprep.subr.bf16.mxu0 0
        %670 = vmatpush1.bf16.msra.mxu0 0
        %671 = vmatprep.subr.bf16.mxu0 0
        %672 = vmatpush1.bf16.msra.mxu0 0
        %673 = vmatprep.subr.bf16.mxu0 0
        %674 = vmatpush1.bf16.msra.mxu0 0
        %675 = vmatprep.subr.bf16.mxu0 0
        %676 = vmatpush1.bf16.msra.mxu0 0
        %677 = vmatprep.subr.bf16.mxu0 0
        %678 = vmatpush1.bf16.msra.mxu0 0
        %679 = vmatprep.subr.bf16.mxu0 0
        %680 = vmatpush1.bf16.msra.mxu0 0
        %681 = vmatprep.mubr.bf16.mxu0 0
        %682 = vmatmul.mubr.bf16.gmra.mrb[0].mxu0 %v596
        %v683 = vpop.f32.mrb[0].mxu0
        %v684 = vadd.f32 0.0, %v683
        %v685 = vpop.f32.mrb[0].mxu0
        %v686 = vpop.f32.mrb[0].mxu0
        %v687 = vpop.f32.mrb[0].mxu0
        %688 = vdwg.mxu0
        %689 = vst [vmem:[%s295] sm:$0xff] %v643
        %690 = vst [vmem:[%s295 + $0x8] sm:$0xff] %v645
        %691 = vst [vmem:[%s295 + $0x10] sm:$0xff] %v684
        %v692 = vld [vmem:[%s3] sm:$0x7]
        %v694 = vlaneseq
        %v695 = vshrl.u32 %v694, 7
        %v696 = vsub.s32 0, %v695
        %v697 = vrot.slane %v692, %v696
        %v698 = vlaneseq
        %v699 = vshrl.u32 %v698, 7
        %v700 = vsub.s32 1, %v699
        %v701 = vrot.slane %v692, %v700
        %v702 = vlaneseq
        %v703 = vshrl.u32 %v702, 7
        %v704 = vsub.s32 2, %v703
        %v705 = vrot.slane %v692, %v704
        %v709 = vmul.f32 %v643, %v697
        %v710 = vmul.f32 %v645, %v701
        %v711 = vmul.f32 %v684, %v705
        %v712 = vadd.f32 %v709, %v710
        %v713 = vadd.f32 %v712, %v711
        %714 = vadd.xlane.f32.xlu0 %v713
        %v715 = vpop.xlane.xlu0 %714
        %vm716 = vcmask 7168
        %717 = vst.msk [vmem:[%s311] sm:$0xff] %vm716, %v715
        %v718 = vmul.f32 %v709, %v643
        %v719 = vmul.f32 %v710, %v645
        %v720 = vmul.f32 %v711, %v684
        %v721 = vadd.f32 %v718, %v719
        %v722 = vadd.f32 %v721, %v720
        %723 = vadd.xlane.f32.xlu0 %v722
        %v724 = vpop.xlane.xlu0 %723
        %725 = vst.msk [vmem:[%s315] sm:$0xff] %vm716, %v724
        %s726 = sand.u32 %s143, 1
        %s727 = scalar_lea.sflag [#allocation5], %s726
        %s728 = sand.u32 %s143, 1
        %s729 = smul.addr %s728, 24
        %s730 = scalar_lea.vmem [#allocation6], %s729
        %p731 = scmp.lt.s32.totalorder %s25, 1
        %s732 = scalar_select %p731, %s25, 1
        %s733 = smul.addr %s732, 8
        %s734 = scalar_lea.vmem %s6, %s733
        %p735 = scmp.lt.s32.totalorder %s25, 1
        %s736 = scalar_select %p735, %s25, 1
        %s737 = smul.addr %s736, 8
        %s738 = scalar_lea.vmem %s7, %s737
        // Predicated region
        $region45: #{tpu_custom_call.1} parent=39 // pred_check
          %p739 = pneg %p153
        $region46: #{tpu_custom_call.1} parent=39 // pred_check_branch
          %741 = sbr.rel (%p739) target = $region48
        $region47: #{tpu_custom_call.1} parent=39 // pred_region
          %s743 = ssub.s32 384, 384
          %744 = vsyncadd %s727, %s743
          %s745 = smul.addr %s25, 3
          %s746 = smul.addr %s745, 128
          %s747 = scalar_lea.hbm %s5, %s746
          %s749 = sshll.u32 %s730, 4
          %s750 = int_to_ptr.vmem [resolvable:$true] %s749
          %752 = dma.vmem_to_hbm [thread:$0]  %s750, 384, %s747, %s727
        $region48: #{tpu_custom_call.1} parent=39 // pred_fallthru
          _
        // Predicated region
        $region49: #{tpu_custom_call.1} parent=39 // pred_check
          %p753 = pneg %p179
        $region50: #{tpu_custom_call.1} parent=39 // pred_check_branch
          %755 = sbr.rel (%p753) target = $region52
        $region51: #{tpu_custom_call.1} parent=39 // pred_region
          _
        $region52: #{tpu_custom_call.1} parent=39 // pred_fallthru
          _
        // Predicated region
        $region53: #{tpu_custom_call.1} parent=39 // pred_check
          %p756 = pneg %p205
        $region54: #{tpu_custom_call.1} parent=39 // pred_check_branch
          %758 = sbr.rel (%p756) target = $region56
        $region55: #{tpu_custom_call.1} parent=39 // pred_region
          _
        $region56: #{tpu_custom_call.1} parent=39 // pred_fallthru
          _
      $region40: #{tpu_custom_call.1} parent=5 // pred_fallthru
        _
      %p759 = scmp.le.s32.totalorder 2, %s20
      // Predicated region
      $region57: #{tpu_custom_call.1} parent=5 // pred_check
        %p760 = pneg %p759
      $region58: #{tpu_custom_call.1} parent=5 // pred_check_branch
        %762 = sbr.rel (%p760) target = $region60
      $region59: #{tpu_custom_call.1} parent=5 // pred_region
        %s763 = ssub.s32 %s20, 2
        // Predicated region
        $region61: #{tpu_custom_call.1} parent=59 // pred_check
          %p764 = pneg %p159
        $region62: #{tpu_custom_call.1} parent=59 // pred_check_branch
          %766 = sbr.rel (%p764) target = $region64
        $region63: #{tpu_custom_call.1} parent=59 // pred_region
          %s767 = sand.u32 %s144, 1
          %s768 = scalar_lea.sflag [#allocation5], %s767
          %s769 = sand.u32 %s144, 1
          %s770 = smul.addr %s769, 24
          %s771 = scalar_lea.vmem [#allocation6], %s770
          %772 = dma.done %s768, 384
        $region64: #{tpu_custom_call.1} parent=59 // pred_fallthru
          _
        // Predicated region
        $region65: #{tpu_custom_call.1} parent=59 // pred_check
          %p773 = pneg %p185
        $region66: #{tpu_custom_call.1} parent=59 // pred_check_branch
          %775 = sbr.rel (%p773) target = $region68
        $region67: #{tpu_custom_call.1} parent=59 // pred_region
          %p776 = scmp.lt.s32.totalorder %s26, 1
          %s777 = scalar_select %p776, %s26, 1
          %s778 = smul.addr %s777, 8
          %s779 = scalar_lea.vmem %s6, %s778
        $region68: #{tpu_custom_call.1} parent=59 // pred_fallthru
          _
        // Predicated region
        $region69: #{tpu_custom_call.1} parent=59 // pred_check
          %p780 = pneg %p211
        $region70: #{tpu_custom_call.1} parent=59 // pred_check_branch
          %782 = sbr.rel (%p780) target = $region72
        $region71: #{tpu_custom_call.1} parent=59 // pred_region
          %p783 = scmp.lt.s32.totalorder %s26, 1
          %s784 = scalar_select %p783, %s26, 1
          %s785 = smul.addr %s784, 8
          %s786 = scalar_lea.vmem %s7, %s785
        $region72: #{tpu_custom_call.1} parent=59 // pred_fallthru
          _
      $region60: #{tpu_custom_call.1} parent=5 // pred_fallthru
        _
    $region6: #{tpu_custom_call.1} parent=1 // loop_footer
      %s24 = sadd.s32 1, %s20
    $region7: #{tpu_custom_call.1} parent=1 // loop_footer_branch
      %19 = sbr.rel target = $region3
    $region8: #{tpu_custom_call.1} parent=1 // loop_exit
      _
    %787 = vsyncpa [#allocation4], 1
    %s788 = scalar_lea.sflag [#allocation4], 1
    %789 = vsyncpa %s788, 1
    %790 = vsyncpa [#allocation5], 1
    %s791 = scalar_lea.sflag [#allocation5], 1
    %792 = vsyncpa %s791, 1

</llo_original>
